<compile_context>
chip_gen: v7x
topology: tpu7x:2x2x1
jax: 0.10.0
libtpu: 0.0.40
codegen_flags: <defaults>
</compile_context>

<pallas_src>
import functools

import jax
import jax.numpy as jnp
from jax.experimental import pallas as pl
from jax.experimental.pallas import tpu as pltpu

# ---------------------------------------------------------------------------
# Module hyper-parameters.
K = 32                      # input_sizex == output_sizex == DIMx2
HIDDEN = 50                 # hidden_sizex (torch)
HIDDEN_PAD = 64             # hidden dim zero-padded to a multiple of 8
PACK = 4                    # gradient rows packed per 128-lane group

# Packed parameter-buffer layout (rows; width = PACK * HIDDEN_PAD = 256).
PARAM_COLS = PACK * HIDDEN_PAD                # 256
W1_OFF = 0                                    # rows [0, 128)   : blockdiag W1 (128, 256)
W2_OFF = W1_OFF + PACK * K                    # rows [128, 384) : blockdiag W2 (256, 256)
W3_OFF = W2_OFF + PACK * HIDDEN_PAD           # rows [384, 640) : blockdiag W3 (256, 128) in cols [:128]
B1_ROW = W3_OFF + PACK * HIDDEN_PAD           # row 640 : b1 tiled 4x (256)
B2_ROW = B1_ROW + 8                           # row 648 : b2 tiled 4x (256)
B3_ROW = B2_ROW + 8                           # row 656 : b3 tiled 4x (128) in cols [:128]
PARAM_ROWS = B3_ROW + 8                       # 664 (multiple of 8)

MAX_PACKED_BLOCK = 2048     # max packed rows per grid step (= 8192 gradient rows)
MIN_KERNEL_ROWS = 256       # below this, skip pallas_call (launch overhead dominates)


def _cdiv(a, b):
    return -(-a // b)


def _round_up(x, m):
    return _cdiv(x, m) * m


def _choose_block(packed_rows, max_block):
    """Packed-row block: multiple of 8, <= max_block, and >=2 grid steps when possible."""
    if packed_rows <= 8:
        return 8
    n_blocks = max(2, _cdiv(packed_rows, max_block))
    return min(_round_up(_cdiv(packed_rows, n_blocks), 8), max_block)


# ---------------------------------------------------------------------------
# Kernel: fused 3-layer MLP on lane-packed rows.
def _mlp_packed_kernel(x_ref, p_ref, o_ref):
    x = x_ref[...].astype(jnp.float32)                                 # [M, 128]

    w1 = p_ref[W1_OFF:W1_OFF + PACK * K, :]                            # [128, 256]
    w2 = p_ref[W2_OFF:W2_OFF + PACK * HIDDEN_PAD, :]                   # [256, 256]
    w3 = p_ref[W3_OFF:W3_OFF + PACK * HIDDEN_PAD, 0:PACK * K]          # [256, 128]
    b1 = p_ref[B1_ROW:B1_ROW + 1, :]                                   # [1, 256]
    b2 = p_ref[B2_ROW:B2_ROW + 1, :]                                   # [1, 256]
    b3 = p_ref[B3_ROW:B3_ROW + 1, 0:PACK * K]                          # [1, 128]

    h1 = jnp.maximum(jnp.dot(x, w1, preferred_element_type=jnp.float32) + b1, 0.0)
    h2 = jnp.maximum(jnp.dot(h1, w2, preferred_element_type=jnp.float32) + b2, 0.0)
    y = jnp.dot(h2, w3, preferred_element_type=jnp.float32) + b3       # [M, 128]
    o_ref[...] = y.astype(o_ref.dtype)


@functools.partial(jax.jit, static_argnames=("m_block",))
def _forward_batched(xp, packed_params, *, m_block):
    p_rows = xp.shape[0]
    return pl.pallas_call(
        _mlp_packed_kernel,
        out_shape=jax.ShapeDtypeStruct((p_rows, PACK * K), xp.dtype),
        grid=(p_rows // m_block,),
        in_specs=[
            pl.BlockSpec((m_block, PACK * K), lambda i: (i, 0)),
            # Whole parameter buffer, constant block index -> DMA'd once, VMEM resident.
            pl.BlockSpec((PARAM_ROWS, PARAM_COLS), lambda i: (0, 0)),
        ],
        out_specs=pl.BlockSpec((m_block, PACK * K), lambda i: (i, 0)),
        compiler_params=pltpu.CompilerParams(dimension_semantics=("parallel",)),
    )(xp, packed_params)


@jax.jit
def _forward_small(x2d, w1_t, b1, w2_t, b2, w3_t, b3):
    """Plain-JAX path for tiny batches / the original single-gradient signature."""
    h1 = jnp.maximum(x2d @ w1_t + b1, 0.0)
    h2 = jnp.maximum(h1 @ w2_t + b2, 0.0)
    return h2 @ w3_t + b3


# ---------------------------------------------------------------------------
# Public wrapper: equivalent of Optimizee_x.forward ([K] -> [K] or [N, K] -> [N, K]).
def optimizee_x_forward(gradients, kernel_params, *,
                        max_block=MAX_PACKED_BLOCK, min_kernel_rows=MIN_KERNEL_ROWS):
    single = gradients.ndim == 1
    x2d = gradients[None, :] if single else gradients
    n = x2d.shape[0]

    if n < min_kernel_rows:
        out = _forward_small(
            x2d.astype(jnp.float32),
            kernel_params["w1_t"], kernel_params["b1"],
            kernel_params["w2_t"], kernel_params["b2"],
            kernel_params["w3_t"], kernel_params["b3"]).astype(gradients.dtype)
        return out[0] if single else out

    packed_rows = _cdiv(n, PACK)
    blk = _choose_block(packed_rows, max_block)
    packed_rows_pad = _round_up(packed_rows, blk)
    n_pad = packed_rows_pad * PACK
    if n_pad != n:
        x2d = jnp.pad(x2d, ((0, n_pad - n), (0, 0)))
    xp = x2d.reshape(packed_rows_pad, PACK * K)          # free row-major reshape

    outp = _forward_batched(xp, kernel_params["packed"], m_block=blk)
    out = outp.reshape(n_pad, K)
    if n_pad != n:
        out = out[:n]
    return out[0] if single else out


# ---------------------------------------------------------------------------
# One-time parameter preparation (torch Linear layout -> packed kernel layout).
def prepare_params(torch_params):
    p = torch_params
    w1_t = p["fnn1_w"].T.astype(jnp.float32)     # (K, HIDDEN)
    w2_t = p["fnn2_w"].T.astype(jnp.float32)     # (HIDDEN, HIDDEN)
    w3_t = p["out_w"].T.astype(jnp.float32)      # (HIDDEN, K)
    b1 = p["fnn1_b"].astype(jnp.float32)
    b2 = p["fnn2_b"].astype(jnp.float32)
    b3 = p["out_b"].astype(jnp.float32)

    def pad2(w, rows, cols):
        return jnp.zeros((rows, cols), jnp.float32).at[:w.shape[0], :w.shape[1]].set(w)

    w1p = pad2(w1_t, K, HIDDEN_PAD)
    w2p = pad2(w2_t, HIDDEN_PAD, HIDDEN_PAD)
    w3p = pad2(w3_t, HIDDEN_PAD, K)
    b1p = jnp.zeros((HIDDEN_PAD,), jnp.float32).at[:HIDDEN].set(b1)
    b2p = jnp.zeros((HIDDEN_PAD,), jnp.float32).at[:HIDDEN].set(b2)

    def block_diag(a, copies):
        r, c = a.shape
        m = jnp.zeros((copies * r, copies * c), a.dtype)
        for i in range(copies):
            m = m.at[i * r:(i + 1) * r, i * c:(i + 1) * c].set(a)
        return m

    packed = jnp.zeros((PARAM_ROWS, PARAM_COLS), jnp.float32)
    packed = packed.at[W1_OFF:W1_OFF + PACK * K, :].set(block_diag(w1p, PACK))
    packed = packed.at[W2_OFF:W2_OFF + PACK * HIDDEN_PAD, :].set(block_diag(w2p, PACK))
    packed = packed.at[W3_OFF:W3_OFF + PACK * HIDDEN_PAD, :PACK * K].set(block_diag(w3p, PACK))
    packed = packed.at[B1_ROW, :].set(jnp.tile(b1p, PACK))
    packed = packed.at[B2_ROW, :].set(jnp.tile(b2p, PACK))
    packed = packed.at[B3_ROW, :PACK * K].set(jnp.tile(b3, PACK))

    return {
        "packed": packed,                 # single (664, 256) f32 buffer for the kernel
        "w1_t": w1_t, "b1": b1,           # unpadded transposed params for the tiny-n path
        "w2_t": w2_t, "b2": b2,
        "w3_t": w3_t, "b3": b3,
    }


def init_params(key):
    """torch.nn.Linear-style init (uniform +-1/sqrt(fan_in)), stored in torch layout."""
    ks = jax.random.split(key, 6)

    def lin(kw, kb, fan_in, fan_out):
        bound = 1.0 / jnp.sqrt(fan_in)
        w = jax.random.uniform(kw, (fan_out, fan_in), jnp.float32, -bound, bound)
        b = jax.random.uniform(kb, (fan_out,), jnp.float32, -bound, bound)
        return w, b

    w1, b1 = lin(ks[0], ks[1], K, HIDDEN)
    w2, b2 = lin(ks[2], ks[3], HIDDEN, HIDDEN)
    w3, b3 = lin(ks[4], ks[5], HIDDEN, K)
    return {"fnn1_w": w1, "fnn1_b": b1,
            "fnn2_w": w2, "fnn2_b": b2,
            "out_w": w3, "out_b": b3}


def _reference_f32(grads2d, p):
    """Full-precision reference matching the PyTorch forward exactly."""
    h1 = jnp.maximum(grads2d @ p["fnn1_w"].T + p["fnn1_b"], 0.0)
    h2 = jnp.maximum(h1 @ p["fnn2_w"].T + p["fnn2_b"], 0.0)
    return h2 @ p["out_w"].T + p["out_b"]


# ---------------------------------------------------------------------------
if __name__ == "__main__":
    key = jax.random.PRNGKey(0)
    kparam, kgrad = jax.random.split(key)

    torch_params = init_params(kparam)
    kernel_params = prepare_params(torch_params)       # one-time layout prep

    # Batched usage: many gradient rows in a single pallas_call (2 grid steps of 512 packed rows).
    N = 4096
    grads = jax.random.normal(kgrad, (N, K), jnp.float32)
    out = jax.block_until_ready(optimizee_x_forward(grads, kernel_params))
    assert out.shape == (N, K) and out.dtype == jnp.float32
    ref = _reference_f32(grads, torch_params)
    err = float(jnp.max(jnp.abs(out - ref)))
    assert err < 5e-2, f"batched kernel drifted vs f32 reference: {err}"

    # Awkward N: exercises adaptive blocking + row padding (padding sliced off).
    N2 = 1037
    out2 = jax.block_until_ready(optimizee_x_forward(grads[:N2], kernel_params))
    assert out2.shape == (N2, K)
    assert float(jnp.max(jnp.abs(out2 - ref[:N2]))) < 5e-2, "awkward-N mismatch"

    # Original single-gradient torch signature ([K] -> [K]); tiny-n bypass (no kernel launch).
    out1 = jax.block_until_ready(optimizee_x_forward(grads[0], kernel_params))
    assert out1.shape == (K,)
    assert float(jnp.max(jnp.abs(out1 - ref[0]))) < 5e-2, "single-gradient mismatch"

    # Optional bf16 HBM I/O path (halves gradient/output DMA traffic in the HBM-bound regime).
    out_bf16 = jax.block_until_ready(
        optimizee_x_forward(grads.astype(jnp.bfloat16), kernel_params))
    assert out_bf16.shape == (N, K) and out_bf16.dtype == jnp.bfloat16
    assert float(jnp.max(jnp.abs(out_bf16.astype(jnp.float32) - ref))) < 0.25, "bf16 path drifted"

    print("KERNEL_OK")
</pallas_src>

<mosaic_0001>
module attributes {stable_mosaic.version = 11 : i64} {
  func.func @_mlp_packed_kernel(%arg0: i32, %arg1: memref<512x128xf32, #tpu.memory_space<vmem>>, %arg2: memref<664x256xf32, #tpu.memory_space<vmem>>, %arg3: memref<512x128xf32, #tpu.memory_space<vmem>>) attributes {dimension_semantics = [#tpu.dimension_semantics<parallel>], iteration_bounds = array<i64: 2>, scalar_prefetch = 0 : i64, scratch_operands = 0 : i64, tpu.core_type = #tpu.core_type<tc>, window_params = [{transform_indices = @transform_0, window_bounds = array<i64: 512, 128>}, {pipeline_mode = #tpu.pipeline_mode<synchronous>, transform_indices = @transform_1, window_bounds = array<i64: 664, 256>}, {transform_indices = @transform_2, window_bounds = array<i64: 512, 128>}]} {
    %c0 = arith.constant 0 : index
    %c0_0 = arith.constant 0 : index
    %0 = vector.load %arg1[%c0, %c0_0] : memref<512x128xf32, #tpu.memory_space<vmem>>, vector<512x128xf32>
    %c0_1 = arith.constant 0 : index
    %c0_2 = arith.constant 0 : index
    %1 = vector.load %arg2[%c0_1, %c0_2] : memref<664x256xf32, #tpu.memory_space<vmem>>, vector<128x256xf32>
    %c128 = arith.constant 128 : index
    %c0_3 = arith.constant 0 : index
    %2 = vector.load %arg2[%c128, %c0_3] : memref<664x256xf32, #tpu.memory_space<vmem>>, vector<256x256xf32>
    %c384 = arith.constant 384 : index
    %c0_4 = arith.constant 0 : index
    %3 = vector.load %arg2[%c384, %c0_4] : memref<664x256xf32, #tpu.memory_space<vmem>>, vector<256x128xf32>
    %c640 = arith.constant 640 : index
    %c0_5 = arith.constant 0 : index
    %4 = vector.load %arg2[%c640, %c0_5] : memref<664x256xf32, #tpu.memory_space<vmem>>, vector<1x256xf32>
    %c648 = arith.constant 648 : index
    %c0_6 = arith.constant 0 : index
    %5 = vector.load %arg2[%c648, %c0_6] : memref<664x256xf32, #tpu.memory_space<vmem>>, vector<1x256xf32>
    %c656 = arith.constant 656 : index
    %c0_7 = arith.constant 0 : index
    %6 = vector.load %arg2[%c656, %c0_7] : memref<664x256xf32, #tpu.memory_space<vmem>>, vector<1x128xf32>
    %cst = arith.constant dense<0.000000e+00> : vector<512x256xf32>
    %7 = tpu.matmul %0, %1, %cst {dimension_numbers = #tpu.dot_dimension_numbers<[1], [0], [0], [1], [0, 0, 1, 1], [], []>} : vector<512x128xf32>, vector<128x256xf32>, vector<512x256xf32> -> vector<512x256xf32>
    %8 = vector.broadcast %4 : vector<1x256xf32> to vector<512x256xf32>
    %9 = arith.addf %7, %8 : vector<512x256xf32>
    %cst_8 = arith.constant 0.000000e+00 : f32
    %10 = vector.broadcast %cst_8 : f32 to vector<512x256xf32>
    %11 = arith.maximumf %9, %10 : vector<512x256xf32>
    %cst_9 = arith.constant dense<0.000000e+00> : vector<512x256xf32>
    %12 = tpu.matmul %11, %2, %cst_9 {dimension_numbers = #tpu.dot_dimension_numbers<[1], [0], [0], [1], [0, 0, 1, 1], [], []>} : vector<512x256xf32>, vector<256x256xf32>, vector<512x256xf32> -> vector<512x256xf32>
    %13 = vector.broadcast %5 : vector<1x256xf32> to vector<512x256xf32>
    %14 = arith.addf %12, %13 : vector<512x256xf32>
    %cst_10 = arith.constant 0.000000e+00 : f32
    %15 = vector.broadcast %cst_10 : f32 to vector<512x256xf32>
    %16 = arith.maximumf %14, %15 : vector<512x256xf32>
    %cst_11 = arith.constant dense<0.000000e+00> : vector<512x128xf32>
    %17 = tpu.matmul %16, %3, %cst_11 {dimension_numbers = #tpu.dot_dimension_numbers<[1], [0], [0], [1], [0, 0, 1, 1], [], []>} : vector<512x256xf32>, vector<256x128xf32>, vector<512x128xf32> -> vector<512x128xf32>
    %18 = vector.broadcast %6 : vector<1x128xf32> to vector<512x128xf32>
    %19 = arith.addf %17, %18 : vector<512x128xf32>
    %c0_12 = arith.constant 0 : index
    %c0_13 = arith.constant 0 : index
    %20 = vector.load %arg3[%c0_12, %c0_13] : memref<512x128xf32, #tpu.memory_space<vmem>>, vector<512x128xf32>
    tpu.vector_store %arg3[%c0_12, %c0_13], %19 {strides = array<i32>} : memref<512x128xf32, #tpu.memory_space<vmem>>, vector<512x128xf32>,
    return
  }
  func.func @transform_0(%arg0: i32) -> (i32, i32) {
    %c0_i32 = arith.constant 0 : i32
    %c0_i32_0 = arith.constant 0 : i32
    return %arg0, %c0_i32 : i32, i32
  }
  func.func @transform_1(%arg0: i32) -> (i32, i32) {
    %c0_i32 = arith.constant 0 : i32
    %c0_i32_0 = arith.constant 0 : i32
    %c0_i32_1 = arith.constant 0 : i32
    return %c0_i32, %c0_i32_0 : i32, i32
  }
  func.func @transform_2(%arg0: i32) -> (i32, i32) {
    %c0_i32 = arith.constant 0 : i32
    %c0_i32_0 = arith.constant 0 : i32
    return %arg0, %c0_i32 : i32, i32
  }
}

</mosaic_0001>

<llo_original>
// kernel: _forward_batched.1
$region0: #{_forward_batched.1}
  #allocation0 [shape = 'u32[]', space=smem, size = 0x4, offset = 0x4, fixed_abs, tag = 'smem constant byte address 0x4 - core index']
  #allocation1 [shape = 'u32[144,128]{1,0:T(1,128)}', space=vmem, size = 0x12000, scoped, tag = 'internal scratch']
  %s0 = inlined_call_operand.hbm [shape: f32[1024,128], index: 0, kind: input, shape index: {}]
  %s1 = inlined_call_operand.hbm [shape: f32[664,256], index: 1, kind: input, shape index: {}]
  %s2 = inlined_call_operand.hbm [shape: f32[1024,128], index: 2, kind: output, shape index: {}]
  %s3 = sld [smem:[#allocation0]]
  $region49: #{_forward_batched.1} parent=0
    _
  %s5 = ssub.s32 1, %s3
  %s6 = scalar_select 0, %s5, %s3
  $region1: #{_forward_batched.1} parent=0
    #allocation2 [shape = 'u8[524288]{0}', space=vmem, size = 0x80000, scoped, tag = 'input window, operand 0']
    #allocation3 [shape = 's32[2]{0}', space=sflag, size = 0x8, scoped, tag = 'scoped memory for _forward_batched.1']
    #allocation4 [shape = 's32[2]{0}', space=sflag, size = 0x8, scoped, tag = 'scoped memory for _forward_batched.1']
    #allocation5 [shape = 'u8[679936]{0}', space=vmem, size = 0xa6000, scoped, tag = 'input window, operand 1, single buffered']
    #allocation6 [shape = 's32[1]{0}', space=sflag, size = 0x4, scoped, tag = 'scoped memory for _forward_batched.1']
    #allocation7 [shape = 'u8[524288]{0}', space=vmem, size = 0x80000, scoped, tag = 'output window, operand 0']
    %7 = vsyncpa [#allocation3], 0
    %s8 = scalar_lea.sflag [#allocation3], 1
    %9 = vsyncpa %s8, 0
    %10 = vsyncpa [#allocation6], 0
    %11 = vsyncpa [#allocation4], 0
    %s12 = scalar_lea.sflag [#allocation4], 1
    %13 = vsyncpa %s12, 0
    loop: start=0, step=1, limit=4
    $region2: #{_forward_batched.1} parent=1 // loop_pre_header
      _
    $region3: #{_forward_batched.1} parent=1 // loop_header
      %s15 = sphi 0, %s19
      %p16 = scmp.ge.s32.totalorder %s15, 4
      %s25 = sphi 0, %s27
      %s28 = sphi 0, %s25
      %s29 = sphi 0, %s28
      %s45 = sphi 0, %s29
      %s49 = sphi 0, %s49
      %s51 = sphi 0, %s49
      %s52 = sphi 0, %s51
      %s66 = sphi 0, %s52
      %s72 = sphi 0, %s74
      %s75 = sphi 0, %s72
      %s76 = sphi 0, %s75
      %s92 = sphi 0, %s76
    $region4: #{_forward_batched.1} parent=1 // loop_header_branch
      %18 = sbr.rel (%p16) target = $region8
    $region5: #{_forward_batched.1} parent=1 // loop_body
      %s20 = ssub.s32 %s15, 1
      %s21 = ssub.s32 %s15, 2
      %s22 = sadd.s32 %s15, 1
      %s23 = ssub.s32 %s15, %s22
      %p24 = scmp.eq.s32.totalorder %s23, 0
      %s26 = sadd.s32 %s25, 1
      %s27 = scalar_select %p24, %s25, %s26
      %p30 = pneg %p24
      %p31 = scmp.eq.s32.totalorder %s15, 1
      %p32 = por %p30, %p31
      %p33 = scmp.ne.s32.totalorder %s25, %s28
      %p34 = scmp.eq.s32.totalorder %s15, 0
      %p35 = por %p33, %p34
      %p36 = scmp.ne.s32.totalorder %s25, %s28
      %p37 = scmp.eq.s32.totalorder %s20, 1
      %p38 = por %p36, %p37
      %p39 = scmp.ne.s32.totalorder %s28, %s29
      %p40 = scmp.eq.s32.totalorder %s20, 0
      %p41 = por %p39, %p40
      %p42 = scmp.ne.s32.totalorder %s28, %s29
      %p43 = scmp.eq.s32.totalorder %s21, 1
      %p44 = por %p42, %p43
      %p46 = scmp.ne.s32.totalorder %s29, %s45
      %p47 = scmp.eq.s32.totalorder %s21, 0
      %p48 = por %p46, %p47
      %s50 = sadd.s32 %s49, 1
      %p53 = scmp.eq.s32.totalorder %s15, 1
      %p54 = scmp.ne.s32.totalorder %s49, %s51
      %p55 = scmp.eq.s32.totalorder %s15, 0
      %p56 = por %p54, %p55
      %p57 = scmp.ne.s32.totalorder %s49, %s51
      %p58 = scmp.eq.s32.totalorder %s20, 1
      %p59 = por %p57, %p58
      %p60 = scmp.ne.s32.totalorder %s51, %s52
      %p61 = scmp.eq.s32.totalorder %s20, 0
      %p62 = por %p60, %p61
      %p63 = scmp.ne.s32.totalorder %s51, %s52
      %p64 = scmp.eq.s32.totalorder %s21, 1
      %p65 = por %p63, %p64
      %p67 = scmp.ne.s32.totalorder %s52, %s66
      %p68 = scmp.eq.s32.totalorder %s21, 0
      %p69 = por %p67, %p68
      %s70 = ssub.s32 %s15, %s22
      %p71 = scmp.eq.s32.totalorder %s70, 0
      %s73 = sadd.s32 %s72, 1
      %s74 = scalar_select %p71, %s72, %s73
      %p77 = pneg %p71
      %p78 = scmp.eq.s32.totalorder %s15, 1
      %p79 = por %p77, %p78
      %p80 = scmp.ne.s32.totalorder %s72, %s75
      %p81 = scmp.eq.s32.totalorder %s15, 0
      %p82 = por %p80, %p81
      %p83 = scmp.ne.s32.totalorder %s72, %s75
      %p84 = scmp.eq.s32.totalorder %s20, 1
      %p85 = por %p83, %p84
      %p86 = scmp.ne.s32.totalorder %s75, %s76
      %p87 = scmp.eq.s32.totalorder %s20, 0
      %p88 = por %p86, %p87
      %p89 = scmp.ne.s32.totalorder %s75, %s76
      %p90 = scmp.eq.s32.totalorder %s21, 1
      %p91 = por %p89, %p90
      %p93 = scmp.ne.s32.totalorder %s76, %s92
      %p94 = scmp.eq.s32.totalorder %s21, 0
      %p95 = por %p93, %p94
      %p96 = scmp.le.s32.totalorder 1, %s15
      %p97 = scmp.lt.s32.totalorder %s15, 3
      %p98 = pnand %p96, %p97
      %p99 = pneg %p98
      // Predicated region
      $region9: #{_forward_batched.1} parent=5 // pred_check
        _
      $region10: #{_forward_batched.1} parent=5 // pred_check_branch
        %101 = sbr.rel (%p98) target = $region12
      $region11: #{_forward_batched.1} parent=5 // pred_region
        %s102 = ssub.s32 %s15, 1
        // Predicated region
        $region13: #{_forward_batched.1} parent=11 // pred_check
          %p103 = pneg %p62
        $region14: #{_forward_batched.1} parent=11 // pred_check_branch
          %105 = sbr.rel (%p103) target = $region16
        $region15: #{_forward_batched.1} parent=11 // pred_region
          %s107 = ssub.s32 21248, 21248
          %108 = vsyncadd [#allocation6], %s107
          %s109 = sshll.u32 [#allocation5], 4
          %s110 = int_to_ptr.vmem [resolvable:$true] %s109
          %115 = dma.hbm_to_vmem [thread:$0]  %s1, 21248, %s110, [#allocation6], 256, 256, 16
        $region16: #{_forward_batched.1} parent=11 // pred_fallthru
          _
      $region12: #{_forward_batched.1} parent=5 // pred_fallthru
        _
      %p116 = scmp.lt.s32.totalorder %s15, 2
      // Predicated region
      $region17: #{_forward_batched.1} parent=5 // pred_check
        %p117 = pneg %p116
      $region18: #{_forward_batched.1} parent=5 // pred_check_branch
        %119 = sbr.rel (%p117) target = $region20
      $region19: #{_forward_batched.1} parent=5 // pred_region
        // Predicated region
        $region21: #{_forward_batched.1} parent=19 // pred_check
          %p120 = pneg %p35
        $region22: #{_forward_batched.1} parent=19 // pred_check_branch
          %122 = sbr.rel (%p120) target = $region24
        $region23: #{_forward_batched.1} parent=19 // pred_region
          %s123 = sand.u32 %s25, 1
          %s124 = scalar_lea.sflag [#allocation3], %s123
          %s125 = sand.u32 %s25, 1
          %s126 = smul.addr %s125, 512
          %s127 = scalar_lea.vmem [#allocation2], %s126
          %s128 = smul.u32 64, %s15
          %s130 = ssub.s32 8192, 8192
          %131 = vsyncadd %s124, %s130
          %s132 = smul.addr %s128, 128
          %s133 = scalar_lea.hbm %s0, %s132
          %s134 = sshll.u32 %s127, 4
          %s135 = int_to_ptr.vmem [resolvable:$true] %s134
          %140 = dma.hbm_to_vmem [thread:$0]  %s133, 8192, %s135, %s124, 128, 128, 8
        $region24: #{_forward_batched.1} parent=19 // pred_fallthru
          _
      $region20: #{_forward_batched.1} parent=5 // pred_fallthru
        _
      %p141 = scmp.le.s32.totalorder 1, %s15
      %p142 = scmp.lt.s32.totalorder %s15, 3
      %p143 = pnand %p141, %p142
      %p144 = pneg %p143
      // Predicated region
      $region25: #{_forward_batched.1} parent=5 // pred_check
        _
      $region26: #{_forward_batched.1} parent=5 // pred_check_branch
        %146 = sbr.rel (%p143) target = $region28
      $region27: #{_forward_batched.1} parent=5 // pred_region
        %s147 = ssub.s32 %s15, 1
        %s148 = sand.u32 %s28, 1
        %s149 = scalar_lea.sflag [#allocation3], %s148
        %s150 = sand.u32 %s28, 1
        %s151 = smul.addr %s150, 512
        %s152 = scalar_lea.vmem [#allocation2], %s151
        // Predicated region
        $region29: #{_forward_batched.1} parent=27 // pred_check
          %p153 = pneg %p41
        $region30: #{_forward_batched.1} parent=27 // pred_check_branch
          %155 = sbr.rel (%p153) target = $region32
        $region31: #{_forward_batched.1} parent=27 // pred_region
          %156 = dma.done %s149, 8192
        $region32: #{_forward_batched.1} parent=27 // pred_fallthru
          _
        // Predicated region
        $region33: #{_forward_batched.1} parent=27 // pred_check
          %p157 = pneg %p62
        $region34: #{_forward_batched.1} parent=27 // pred_check_branch
          %159 = sbr.rel (%p157) target = $region36
        $region35: #{_forward_batched.1} parent=27 // pred_region
          %160 = dma.done [#allocation6], 21248
        $region36: #{_forward_batched.1} parent=27 // pred_fallthru
          _
        %s161 = sand.u32 %s28, 1
        %s162 = scalar_lea.sflag [#allocation3], %s161
        %s163 = sand.u32 %s28, 1
        %s164 = smul.addr %s163, 512
        %s165 = scalar_lea.vmem [#allocation2], %s164
        %p166 = pneg %p41
        %p167 = pneg %p38
        %p168 = pneg %p62
        %p169 = pneg %p59
        %p170 = pneg %p88
        %p171 = pneg %p85
        %s172 = sand.u32 %s75, 1
        %s173 = scalar_lea.sflag [#allocation4], %s172
        %s174 = sand.u32 %s75, 1
        %s175 = smul.addr %s174, 512
        %s176 = scalar_lea.vmem [#allocation7], %s175
        %s177 = smul.u32 64, %s20
        %s178 = smul.u32 64, %s20
        %v179 = vld [vmem:[%s152] sm:$0xff]
        %v180 = vld [vmem:[%s152 + $0x8] sm:$0xff]
        %v181 = vld [vmem:[%s152 + $0x10] sm:$0xff]
        %v182 = vld [vmem:[%s152 + $0x18] sm:$0xff]
        %v183 = vld [vmem:[%s152 + $0x20] sm:$0xff]
        %v184 = vld [vmem:[%s152 + $0x28] sm:$0xff]
        %v185 = vld [vmem:[%s152 + $0x30] sm:$0xff]
        %v186 = vld [vmem:[%s152 + $0x38] sm:$0xff]
        %v187 = vld [vmem:[%s152 + $0x40] sm:$0xff]
        %v188 = vld [vmem:[%s152 + $0x48] sm:$0xff]
        %v189 = vld [vmem:[%s152 + $0x50] sm:$0xff]
        %v190 = vld [vmem:[%s152 + $0x58] sm:$0xff]
        %v191 = vld [vmem:[%s152 + $0x60] sm:$0xff]
        %v192 = vld [vmem:[%s152 + $0x68] sm:$0xff]
        %v193 = vld [vmem:[%s152 + $0x70] sm:$0xff]
        %v194 = vld [vmem:[%s152 + $0x78] sm:$0xff]
        %v195 = vld [vmem:[%s152 + $0x80] sm:$0xff]
        %v196 = vld [vmem:[%s152 + $0x88] sm:$0xff]
        %v197 = vld [vmem:[%s152 + $0x90] sm:$0xff]
        %v198 = vld [vmem:[%s152 + $0x98] sm:$0xff]
        %v199 = vld [vmem:[%s152 + $0xa0] sm:$0xff]
        %v200 = vld [vmem:[%s152 + $0xa8] sm:$0xff]
        %v201 = vld [vmem:[%s152 + $0xb0] sm:$0xff]
        %v202 = vld [vmem:[%s152 + $0xb8] sm:$0xff]
        %v203 = vld [vmem:[%s152 + $0xc0] sm:$0xff]
        %v204 = vld [vmem:[%s152 + $0xc8] sm:$0xff]
        %v205 = vld [vmem:[%s152 + $0xd0] sm:$0xff]
        %v206 = vld [vmem:[%s152 + $0xd8] sm:$0xff]
        %v207 = vld [vmem:[%s152 + $0xe0] sm:$0xff]
        %v208 = vld [vmem:[%s152 + $0xe8] sm:$0xff]
        %v209 = vld [vmem:[%s152 + $0xf0] sm:$0xff]
        %v210 = vld [vmem:[%s152 + $0xf8] sm:$0xff]
        %v211 = vld [vmem:[%s152 + $0x100] sm:$0xff]
        %v212 = vld [vmem:[%s152 + $0x108] sm:$0xff]
        %v213 = vld [vmem:[%s152 + $0x110] sm:$0xff]
        %v214 = vld [vmem:[%s152 + $0x118] sm:$0xff]
        %v215 = vld [vmem:[%s152 + $0x120] sm:$0xff]
        %v216 = vld [vmem:[%s152 + $0x128] sm:$0xff]
        %v217 = vld [vmem:[%s152 + $0x130] sm:$0xff]
        %v218 = vld [vmem:[%s152 + $0x138] sm:$0xff]
        %v219 = vld [vmem:[%s152 + $0x140] sm:$0xff]
        %v220 = vld [vmem:[%s152 + $0x148] sm:$0xff]
        %v221 = vld [vmem:[%s152 + $0x150] sm:$0xff]
        %v222 = vld [vmem:[%s152 + $0x158] sm:$0xff]
        %v223 = vld [vmem:[%s152 + $0x160] sm:$0xff]
        %v224 = vld [vmem:[%s152 + $0x168] sm:$0xff]
        %v225 = vld [vmem:[%s152 + $0x170] sm:$0xff]
        %v226 = vld [vmem:[%s152 + $0x178] sm:$0xff]
        %v227 = vld [vmem:[%s152 + $0x180] sm:$0xff]
        %v228 = vld [vmem:[%s152 + $0x188] sm:$0xff]
        %v229 = vld [vmem:[%s152 + $0x190] sm:$0xff]
        %v230 = vld [vmem:[%s152 + $0x198] sm:$0xff]
        %v231 = vld [vmem:[%s152 + $0x1a0] sm:$0xff]
        %v232 = vld [vmem:[%s152 + $0x1a8] sm:$0xff]
        %v233 = vld [vmem:[%s152 + $0x1b0] sm:$0xff]
        %v234 = vld [vmem:[%s152 + $0x1b8] sm:$0xff]
        %v235 = vld [vmem:[%s152 + $0x1c0] sm:$0xff]
        %v236 = vld [vmem:[%s152 + $0x1c8] sm:$0xff]
        %v237 = vld [vmem:[%s152 + $0x1d0] sm:$0xff]
        %v238 = vld [vmem:[%s152 + $0x1d8] sm:$0xff]
        %v239 = vld [vmem:[%s152 + $0x1e0] sm:$0xff]
        %v240 = vld [vmem:[%s152 + $0x1e8] sm:$0xff]
        %v241 = vld [vmem:[%s152 + $0x1f0] sm:$0xff]
        %v242 = vld [vmem:[%s152 + $0x1f8] sm:$0xff]
        %v243 = vld [vmem:[#allocation5] sm:$0xff]
        %v244 = vld [vmem:[#allocation5 + $0x8] sm:$0xff]
        %v245 = vld [vmem:[#allocation5 + $0x10] sm:$0xff]
        %v246 = vld [vmem:[#allocation5 + $0x18] sm:$0xff]
        %v247 = vld [vmem:[#allocation5 + $0x20] sm:$0xff]
        %v248 = vld [vmem:[#allocation5 + $0x28] sm:$0xff]
        %v249 = vld [vmem:[#allocation5 + $0x30] sm:$0xff]
        %v250 = vld [vmem:[#allocation5 + $0x38] sm:$0xff]
        %v251 = vld [vmem:[#allocation5 + $0x40] sm:$0xff]
        %v252 = vld [vmem:[#allocation5 + $0x48] sm:$0xff]
        %v253 = vld [vmem:[#allocation5 + $0x50] sm:$0xff]
        %v254 = vld [vmem:[#allocation5 + $0x58] sm:$0xff]
        %v255 = vld [vmem:[#allocation5 + $0x60] sm:$0xff]
        %v256 = vld [vmem:[#allocation5 + $0x68] sm:$0xff]
        %v257 = vld [vmem:[#allocation5 + $0x70] sm:$0xff]
        %v258 = vld [vmem:[#allocation5 + $0x78] sm:$0xff]
        %v259 = vld [vmem:[#allocation5 + $0x80] sm:$0xff]
        %v260 = vld [vmem:[#allocation5 + $0x88] sm:$0xff]
        %v261 = vld [vmem:[#allocation5 + $0x90] sm:$0xff]
        %v262 = vld [vmem:[#allocation5 + $0x98] sm:$0xff]
        %v263 = vld [vmem:[#allocation5 + $0xa0] sm:$0xff]
        %v264 = vld [vmem:[#allocation5 + $0xa8] sm:$0xff]
        %v265 = vld [vmem:[#allocation5 + $0xb0] sm:$0xff]
        %v266 = vld [vmem:[#allocation5 + $0xb8] sm:$0xff]
        %v267 = vld [vmem:[#allocation5 + $0xc0] sm:$0xff]
        %v268 = vld [vmem:[#allocation5 + $0xc8] sm:$0xff]
        %v269 = vld [vmem:[#allocation5 + $0xd0] sm:$0xff]
        %v270 = vld [vmem:[#allocation5 + $0xd8] sm:$0xff]
        %v271 = vld [vmem:[#allocation5 + $0xe0] sm:$0xff]
        %v272 = vld [vmem:[#allocation5 + $0xe8] sm:$0xff]
        %v273 = vld [vmem:[#allocation5 + $0xf0] sm:$0xff]
        %v274 = vld [vmem:[#allocation5 + $0xf8] sm:$0xff]
        %v275 = vld [vmem:[#allocation5 + $0x100] sm:$0xff]
        %v276 = vld [vmem:[#allocation5 + $0x108] sm:$0xff]
        %v277 = vld [vmem:[#allocation5 + $0x110] sm:$0xff]
        %v278 = vld [vmem:[#allocation5 + $0x118] sm:$0xff]
        %v279 = vld [vmem:[#allocation5 + $0x120] sm:$0xff]
        %v280 = vld [vmem:[#allocation5 + $0x128] sm:$0xff]
        %v281 = vld [vmem:[#allocation5 + $0x130] sm:$0xff]
        %v282 = vld [vmem:[#allocation5 + $0x138] sm:$0xff]
        %v283 = vld [vmem:[#allocation5 + $0x140] sm:$0xff]
        %v284 = vld [vmem:[#allocation5 + $0x148] sm:$0xff]
        %v285 = vld [vmem:[#allocation5 + $0x150] sm:$0xff]
        %v286 = vld [vmem:[#allocation5 + $0x158] sm:$0xff]
        %v287 = vld [vmem:[#allocation5 + $0x160] sm:$0xff]
        %v288 = vld [vmem:[#allocation5 + $0x168] sm:$0xff]
        %v289 = vld [vmem:[#allocation5 + $0x170] sm:$0xff]
        %v290 = vld [vmem:[#allocation5 + $0x178] sm:$0xff]
        %v291 = vld [vmem:[#allocation5 + $0x180] sm:$0xff]
        %v292 = vld [vmem:[#allocation5 + $0x188] sm:$0xff]
        %v293 = vld [vmem:[#allocation5 + $0x190] sm:$0xff]
        %v294 = vld [vmem:[#allocation5 + $0x198] sm:$0xff]
        %v295 = vld [vmem:[#allocation5 + $0x1a0] sm:$0xff]
        %v296 = vld [vmem:[#allocation5 + $0x1a8] sm:$0xff]
        %v297 = vld [vmem:[#allocation5 + $0x1b0] sm:$0xff]
        %v298 = vld [vmem:[#allocation5 + $0x1b8] sm:$0xff]
        %v299 = vld [vmem:[#allocation5 + $0x1c0] sm:$0xff]
        %v300 = vld [vmem:[#allocation5 + $0x1c8] sm:$0xff]
        %v301 = vld [vmem:[#allocation5 + $0x1d0] sm:$0xff]
        %v302 = vld [vmem:[#allocation5 + $0x1d8] sm:$0xff]
        %v303 = vld [vmem:[#allocation5 + $0x1e0] sm:$0xff]
        %v304 = vld [vmem:[#allocation5 + $0x1e8] sm:$0xff]
        %v305 = vld [vmem:[#allocation5 + $0x1f0] sm:$0xff]
        %v306 = vld [vmem:[#allocation5 + $0x1f8] sm:$0xff]
        %v307 = vld [vmem:[#allocation5 + $0x200] sm:$0xff]
        %v308 = vld [vmem:[#allocation5 + $0x208] sm:$0xff]
        %v309 = vld [vmem:[#allocation5 + $0x210] sm:$0xff]
        %v310 = vld [vmem:[#allocation5 + $0x218] sm:$0xff]
        %v311 = vld [vmem:[#allocation5 + $0x220] sm:$0xff]
        %v312 = vld [vmem:[#allocation5 + $0x228] sm:$0xff]
        %v313 = vld [vmem:[#allocation5 + $0x230] sm:$0xff]
        %v314 = vld [vmem:[#allocation5 + $0x238] sm:$0xff]
        %v315 = vld [vmem:[#allocation5 + $0x240] sm:$0xff]
        %v316 = vld [vmem:[#allocation5 + $0x248] sm:$0xff]
        %v317 = vld [vmem:[#allocation5 + $0x250] sm:$0xff]
        %v318 = vld [vmem:[#allocation5 + $0x258] sm:$0xff]
        %v319 = vld [vmem:[#allocation5 + $0x260] sm:$0xff]
        %v320 = vld [vmem:[#allocation5 + $0x268] sm:$0xff]
        %v321 = vld [vmem:[#allocation5 + $0x270] sm:$0xff]
        %v322 = vld [vmem:[#allocation5 + $0x278] sm:$0xff]
        %v323 = vld [vmem:[#allocation5 + $0x280] sm:$0xff]
        %v324 = vld [vmem:[#allocation5 + $0x288] sm:$0xff]
        %v325 = vld [vmem:[#allocation5 + $0x290] sm:$0xff]
        %v326 = vld [vmem:[#allocation5 + $0x298] sm:$0xff]
        %v327 = vld [vmem:[#allocation5 + $0x2a0] sm:$0xff]
        %v328 = vld [vmem:[#allocation5 + $0x2a8] sm:$0xff]
        %v329 = vld [vmem:[#allocation5 + $0x2b0] sm:$0xff]
        %v330 = vld [vmem:[#allocation5 + $0x2b8] sm:$0xff]
        %v331 = vld [vmem:[#allocation5 + $0x2c0] sm:$0xff]
        %v332 = vld [vmem:[#allocation5 + $0x2c8] sm:$0xff]
        %v333 = vld [vmem:[#allocation5 + $0x2d0] sm:$0xff]
        %v334 = vld [vmem:[#allocation5 + $0x2d8] sm:$0xff]
        %v335 = vld [vmem:[#allocation5 + $0x2e0] sm:$0xff]
        %v336 = vld [vmem:[#allocation5 + $0x2e8] sm:$0xff]
        %v337 = vld [vmem:[#allocation5 + $0x2f0] sm:$0xff]
        %v338 = vld [vmem:[#allocation5 + $0x2f8] sm:$0xff]
        %v339 = vld [vmem:[#allocation5 + $0x300] sm:$0xff]
        %v340 = vld [vmem:[#allocation5 + $0x310] sm:$0xff]
        %v341 = vld [vmem:[#allocation5 + $0x320] sm:$0xff]
        %v342 = vld [vmem:[#allocation5 + $0x330] sm:$0xff]
        %v343 = vld [vmem:[#allocation5 + $0x340] sm:$0xff]
        %v344 = vld [vmem:[#allocation5 + $0x350] sm:$0xff]
        %v345 = vld [vmem:[#allocation5 + $0x360] sm:$0xff]
        %v346 = vld [vmem:[#allocation5 + $0x370] sm:$0xff]
        %v347 = vld [vmem:[#allocation5 + $0x380] sm:$0xff]
        %v348 = vld [vmem:[#allocation5 + $0x390] sm:$0xff]
        %v349 = vld [vmem:[#allocation5 + $0x3a0] sm:$0xff]
        %v350 = vld [vmem:[#allocation5 + $0x3b0] sm:$0xff]
        %v351 = vld [vmem:[#allocation5 + $0x3c0] sm:$0xff]
        %v352 = vld [vmem:[#allocation5 + $0x3d0] sm:$0xff]
        %v353 = vld [vmem:[#allocation5 + $0x3e0] sm:$0xff]
        %v354 = vld [vmem:[#allocation5 + $0x3f0] sm:$0xff]
        %v355 = vld [vmem:[#allocation5 + $0x400] sm:$0xff]
        %v356 = vld [vmem:[#allocation5 + $0x410] sm:$0xff]
        %v357 = vld [vmem:[#allocation5 + $0x420] sm:$0xff]
        %v358 = vld [vmem:[#allocation5 + $0x430] sm:$0xff]
        %v359 = vld [vmem:[#allocation5 + $0x440] sm:$0xff]
        %v360 = vld [vmem:[#allocation5 + $0x450] sm:$0xff]
        %v361 = vld [vmem:[#allocation5 + $0x460] sm:$0xff]
        %v362 = vld [vmem:[#allocation5 + $0x470] sm:$0xff]
        %v363 = vld [vmem:[#allocation5 + $0x480] sm:$0xff]
        %v364 = vld [vmem:[#allocation5 + $0x490] sm:$0xff]
        %v365 = vld [vmem:[#allocation5 + $0x4a0] sm:$0xff]
        %v366 = vld [vmem:[#allocation5 + $0x4b0] sm:$0xff]
        %v367 = vld [vmem:[#allocation5 + $0x4c0] sm:$0xff]
        %v368 = vld [vmem:[#allocation5 + $0x4d0] sm:$0xff]
        %v369 = vld [vmem:[#allocation5 + $0x4e0] sm:$0xff]
        %v370 = vld [vmem:[#allocation5 + $0x4f0] sm:$0xff]
        %s371 = scalar_lea.vmem [#allocation5], 1280
        %v372 = vld [vmem:[%s371] ss:$8 sm:$0x3]
        %s373 = scalar_lea.vmem [#allocation5], 1296
        %v374 = vld [vmem:[%s373] ss:$8 sm:$0x3]
        %v375 = vld [vmem:[#allocation5 + $0x520] ss:$0 sm:$0xff]
        %v377 = vlaneseq
        %v378 = vshrl.u32 %v377, 7
        %v379 = vsub.s32 0, %v378
        %v380 = vrot.slane %v372, %v379
        %v381 = vlaneseq
        %v382 = vshrl.u32 %v381, 7
        %v383 = vsub.s32 1, %v382
        %v384 = vrot.slane %v372, %v383
        %387 = vmatprep.subr.mxu0 %v244
        %388 = vmatpush1.msra.mxu0 %v243
        %389 = vmatprep.subr.mxu0 %v246
        %390 = vmatpush1.msra.mxu0 %v245
        %391 = vmatprep.subr.mxu0 %v248
        %392 = vmatpush1.msra.mxu0 %v247
        %393 = vmatprep.subr.mxu0 %v250
        %394 = vmatpush1.msra.mxu0 %v249
        %395 = vmatprep.subr.mxu0 %v252
        %396 = vmatpush1.msra.mxu0 %v251
        %397 = vmatprep.subr.mxu0 %v254
        %398 = vmatpush1.msra.mxu0 %v253
        %399 = vmatprep.subr.mxu0 %v256
        %400 = vmatpush1.msra.mxu0 %v255
        %401 = vmatprep.subr.mxu0 %v258
        %402 = vmatpush1.msra.mxu0 %v257
        %403 = vmatprep.subr.mxu0 %v260
        %404 = vmatpush1.msra.mxu0 %v259
        %405 = vmatprep.subr.mxu0 %v262
        %406 = vmatpush1.msra.mxu0 %v261
        %407 = vmatprep.subr.mxu0 %v264
        %408 = vmatpush1.msra.mxu0 %v263
        %409 = vmatprep.subr.mxu0 %v266
        %410 = vmatpush1.msra.mxu0 %v265
        %411 = vmatprep.subr.mxu0 %v268
        %412 = vmatpush1.msra.mxu0 %v267
        %413 = vmatprep.subr.mxu0 %v270
        %414 = vmatpush1.msra.mxu0 %v269
        %415 = vmatprep.subr.mxu0 %v272
        %416 = vmatpush1.msra.mxu0 %v271
        %417 = vmatprep.subr.mxu0 %v274
        %418 = vmatpush1.msra.mxu0 %v273
        %419 = vmatprep.subr.mxu0 0.0
        %420 = vmatpush1.msra.mxu0 0.0
        %421 = vmatprep.subr.mxu0 0.0
        %422 = vmatpush1.msra.mxu0 0.0
        %423 = vmatprep.subr.mxu0 0.0
        %424 = vmatpush1.msra.mxu0 0.0
        %425 = vmatprep.subr.mxu0 0.0
        %426 = vmatpush1.msra.mxu0 0.0
        %427 = vmatprep.subr.mxu0 0.0
        %428 = vmatpush1.msra.mxu0 0.0
        %429 = vmatprep.subr.mxu0 0.0
        %430 = vmatpush1.msra.mxu0 0.0
        %431 = vmatprep.subr.mxu0 0.0
        %432 = vmatpush1.msra.mxu0 0.0
        %433 = vmatprep.subr.mxu0 0.0
        %434 = vmatpush1.msra.mxu0 0.0
        %435 = vmatprep.subr.mxu0 0.0
        %436 = vmatpush1.msra.mxu0 0.0
        %437 = vmatprep.subr.mxu0 0.0
        %438 = vmatpush1.msra.mxu0 0.0
        %439 = vmatprep.subr.mxu0 0.0
        %440 = vmatpush1.msra.mxu0 0.0
        %441 = vmatprep.subr.mxu0 0.0
        %442 = vmatpush1.msra.mxu0 0.0
        %443 = vmatprep.subr.mxu0 0.0
        %444 = vmatpush1.msra.mxu0 0.0
        %445 = vmatprep.subr.mxu0 0.0
        %446 = vmatpush1.msra.mxu0 0.0
        %447 = vmatprep.subr.mxu0 0.0
        %448 = vmatpush1.msra.mxu0 0.0
        %449 = vmatprep.subr.mxu0 0.0
        %450 = vmatpush1.msra.mxu0 0.0
        %451 = vmatprep.mubr.f32.mxu0 0.0
        %452 = vmatmul.mubr.f32.gmra.mrb[0].mxu0 %v179
        %v453 = vpop.f32.mrb[0].mxu0
        %v454 = vadd.f32 %v380, %v453
        %v455 = vpop.f32.mrb[0].mxu0
        %v456 = vadd.f32 %v384, %v455
        %457 = vmatprep.mubr.f32.mxu0 0.0
        %458 = vmatmul.mubr.f32.gmra.mrb[0].mxu0 %v180
        %v459 = vpop.f32.mrb[0].mxu0
        %v460 = vadd.f32 %v380, %v459
        %v461 = vpop.f32.mrb[0].mxu0
        %v462 = vadd.f32 %v384, %v461
        %463 = vmatprep.mubr.f32.mxu0 0.0
        %464 = vmatmul.mubr.f32.gmra.mrb[0].mxu0 %v181
        %v465 = vpop.f32.mrb[0].mxu0
        %v466 = vadd.f32 %v380, %v465
        %v467 = vpop.f32.mrb[0].mxu0
        %v468 = vadd.f32 %v384, %v467
        %469 = vmatprep.mubr.f32.mxu0 0.0
        %470 = vmatmul.mubr.f32.gmra.mrb[0].mxu0 %v182
        %v471 = vpop.f32.mrb[0].mxu0
        %v472 = vadd.f32 %v380, %v471
        %v473 = vpop.f32.mrb[0].mxu0
        %v474 = vadd.f32 %v384, %v473
        %475 = vmatprep.mubr.f32.mxu0 0.0
        %476 = vmatmul.mubr.f32.gmra.mrb[0].mxu0 %v183
        %v477 = vpop.f32.mrb[0].mxu0
        %v478 = vadd.f32 %v380, %v477
        %v479 = vpop.f32.mrb[0].mxu0
        %v480 = vadd.f32 %v384, %v479
        %481 = vmatprep.mubr.f32.mxu0 0.0
        %482 = vmatmul.mubr.f32.gmra.mrb[0].mxu0 %v184
        %v483 = vpop.f32.mrb[0].mxu0
        %v484 = vadd.f32 %v380, %v483
        %v485 = vpop.f32.mrb[0].mxu0
        %v486 = vadd.f32 %v384, %v485
        %487 = vmatprep.mubr.f32.mxu0 0.0
        %488 = vmatmul.mubr.f32.gmra.mrb[0].mxu0 %v185
        %v489 = vpop.f32.mrb[0].mxu0
        %v490 = vadd.f32 %v380, %v489
        %v491 = vpop.f32.mrb[0].mxu0
        %v492 = vadd.f32 %v384, %v491
        %493 = vmatprep.mubr.f32.mxu0 0.0
        %494 = vmatmul.mubr.f32.gmra.mrb[0].mxu0 %v186
        %v495 = vpop.f32.mrb[0].mxu0
        %v496 = vadd.f32 %v380, %v495
        %v497 = vpop.f32.mrb[0].mxu0
        %v498 = vadd.f32 %v384, %v497
        %499 = vmatprep.mubr.f32.mxu0 0.0
        %500 = vmatmul.mubr.f32.gmra.mrb[0].mxu0 %v187
        %v501 = vpop.f32.mrb[0].mxu0
        %v502 = vadd.f32 %v380, %v501
        %v503 = vpop.f32.mrb[0].mxu0
        %v504 = vadd.f32 %v384, %v503
        %505 = vmatprep.mubr.f32.mxu0 0.0
        %506 = vmatmul.mubr.f32.gmra.mrb[0].mxu0 %v188
        %v507 = vpop.f32.mrb[0].mxu0
        %v508 = vadd.f32 %v380, %v507
        %v509 = vpop.f32.mrb[0].mxu0
        %v510 = vadd.f32 %v384, %v509
        %511 = vmatprep.mubr.f32.mxu0 0.0
        %512 = vmatmul.mubr.f32.gmra.mrb[0].mxu0 %v189
        %v513 = vpop.f32.mrb[0].mxu0
        %v514 = vadd.f32 %v380, %v513
        %v515 = vpop.f32.mrb[0].mxu0
        %v516 = vadd.f32 %v384, %v515
        %517 = vmatprep.mubr.f32.mxu0 0.0
        %518 = vmatmul.mubr.f32.gmra.mrb[0].mxu0 %v190
        %v519 = vpop.f32.mrb[0].mxu0
        %v520 = vadd.f32 %v380, %v519
        %v521 = vpop.f32.mrb[0].mxu0
        %v522 = vadd.f32 %v384, %v521
        %523 = vmatprep.mubr.f32.mxu0 0.0
        %524 = vmatmul.mubr.f32.gmra.mrb[0].mxu0 %v191
        %v525 = vpop.f32.mrb[0].mxu0
        %v526 = vadd.f32 %v380, %v525
        %v527 = vpop.f32.mrb[0].mxu0
        %v528 = vadd.f32 %v384, %v527
        %529 = vmatprep.mubr.f32.mxu0 0.0
        %530 = vmatmul.mubr.f32.gmra.mrb[0].mxu0 %v192
        %v531 = vpop.f32.mrb[0].mxu0
        %v532 = vadd.f32 %v380, %v531
        %v533 = vpop.f32.mrb[0].mxu0
        %v534 = vadd.f32 %v384, %v533
        %535 = vmatprep.mubr.f32.mxu0 0.0
        %536 = vmatmul.mubr.f32.gmra.mrb[0].mxu0 %v193
        %v537 = vpop.f32.mrb[0].mxu0
        %v538 = vadd.f32 %v380, %v537
        %v539 = vpop.f32.mrb[0].mxu0
        %v540 = vadd.f32 %v384, %v539
        %541 = vmatprep.mubr.f32.mxu0 0.0
        %542 = vmatmul.mubr.f32.gmra.mrb[0].mxu0 %v194
        %v543 = vpop.f32.mrb[0].mxu0
        %v544 = vadd.f32 %v380, %v543
        %v545 = vpop.f32.mrb[0].mxu0
        %v546 = vadd.f32 %v384, %v545
        %547 = vmatprep.mubr.f32.mxu0 0.0
        %548 = vmatmul.mubr.f32.gmra.mrb[0].mxu0 %v195
        %v549 = vpop.f32.mrb[0].mxu0
        %v550 = vadd.f32 %v380, %v549
        %v551 = vpop.f32.mrb[0].mxu0
        %v552 = vadd.f32 %v384, %v551
        %553 = vmatprep.mubr.f32.mxu0 0.0
        %554 = vmatmul.mubr.f32.gmra.mrb[0].mxu0 %v196
        %v555 = vpop.f32.mrb[0].mxu0
        %v556 = vadd.f32 %v380, %v555
        %v557 = vpop.f32.mrb[0].mxu0
        %v558 = vadd.f32 %v384, %v557
        %559 = vmatprep.mubr.f32.mxu0 0.0
        %560 = vmatmul.mubr.f32.gmra.mrb[0].mxu0 %v197
        %v561 = vpop.f32.mrb[0].mxu0
        %v562 = vadd.f32 %v380, %v561
        %v563 = vpop.f32.mrb[0].mxu0
        %v564 = vadd.f32 %v384, %v563
        %565 = vmatprep.mubr.f32.mxu0 0.0
        %566 = vmatmul.mubr.f32.gmra.mrb[0].mxu0 %v198
        %v567 = vpop.f32.mrb[0].mxu0
        %v568 = vadd.f32 %v380, %v567
        %v569 = vpop.f32.mrb[0].mxu0
        %v570 = vadd.f32 %v384, %v569
        %571 = vmatprep.mubr.f32.mxu0 0.0
        %572 = vmatmul.mubr.f32.gmra.mrb[0].mxu0 %v199
        %v573 = vpop.f32.mrb[0].mxu0
        %v574 = vadd.f32 %v380, %v573
        %v575 = vpop.f32.mrb[0].mxu0
        %v576 = vadd.f32 %v384, %v575
        %577 = vmatprep.mubr.f32.mxu0 0.0
        %578 = vmatmul.mubr.f32.gmra.mrb[0].mxu0 %v200
        %v579 = vpop.f32.mrb[0].mxu0
        %v580 = vadd.f32 %v380, %v579
        %v581 = vpop.f32.mrb[0].mxu0
        %v582 = vadd.f32 %v384, %v581
        %583 = vmatprep.mubr.f32.mxu0 0.0
        %584 = vmatmul.mubr.f32.gmra.mrb[0].mxu0 %v201
        %v585 = vpop.f32.mrb[0].mxu0
        %v586 = vadd.f32 %v380, %v585
        %v587 = vpop.f32.mrb[0].mxu0
        %v588 = vadd.f32 %v384, %v587
        %589 = vmatprep.mubr.f32.mxu0 0.0
        %590 = vmatmul.mubr.f32.gmra.mrb[0].mxu0 %v202
        %v591 = vpop.f32.mrb[0].mxu0
        %v592 = vadd.f32 %v380, %v591
        %v593 = vpop.f32.mrb[0].mxu0
        %v594 = vadd.f32 %v384, %v593
        %595 = vmatprep.mubr.f32.mxu0 0.0
        %596 = vmatmul.mubr.f32.gmra.mrb[0].mxu0 %v203
        %v597 = vpop.f32.mrb[0].mxu0
        %v598 = vadd.f32 %v380, %v597
        %v599 = vpop.f32.mrb[0].mxu0
        %v600 = vadd.f32 %v384, %v599
        %601 = vmatprep.mubr.f32.mxu0 0.0
        %602 = vmatmul.mubr.f32.gmra.mrb[0].mxu0 %v204
        %v603 = vpop.f32.mrb[0].mxu0
        %v604 = vadd.f32 %v380, %v603
        %v605 = vpop.f32.mrb[0].mxu0
        %v606 = vadd.f32 %v384, %v605
        %607 = vmatprep.mubr.f32.mxu0 0.0
        %608 = vmatmul.mubr.f32.gmra.mrb[0].mxu0 %v205
        %v609 = vpop.f32.mrb[0].mxu0
        %v610 = vadd.f32 %v380, %v609
        %v611 = vpop.f32.mrb[0].mxu0
        %v612 = vadd.f32 %v384, %v611
        %613 = vmatprep.mubr.f32.mxu0 0.0
        %614 = vmatmul.mubr.f32.gmra.mrb[0].mxu0 %v206
        %v615 = vpop.f32.mrb[0].mxu0
        %v616 = vadd.f32 %v380, %v615
        %v617 = vpop.f32.mrb[0].mxu0
        %v618 = vadd.f32 %v384, %v617
        %619 = vmatprep.mubr.f32.mxu0 0.0
        %620 = vmatmul.mubr.f32.gmra.mrb[0].mxu0 %v207
        %v621 = vpop.f32.mrb[0].mxu0
        %v622 = vadd.f32 %v380, %v621
        %v623 = vpop.f32.mrb[0].mxu0
        %v624 = vadd.f32 %v384, %v623
        %625 = vmatprep.mubr.f32.mxu0 0.0
        %626 = vmatmul.mubr.f32.gmra.mrb[0].mxu0 %v208
        %v627 = vpop.f32.mrb[0].mxu0
        %v628 = vadd.f32 %v380, %v627
        %v629 = vpop.f32.mrb[0].mxu0
        %v630 = vadd.f32 %v384, %v629
        %631 = vmatprep.mubr.f32.mxu0 0.0
        %632 = vmatmul.mubr.f32.gmra.mrb[0].mxu0 %v209
        %v633 = vpop.f32.mrb[0].mxu0
        %v634 = vadd.f32 %v380, %v633
        %v635 = vpop.f32.mrb[0].mxu0
        %v636 = vadd.f32 %v384, %v635
        %637 = vmatprep.mubr.f32.mxu0 0.0
        %638 = vmatmul.mubr.f32.gmra.mrb[0].mxu0 %v210
        %v639 = vpop.f32.mrb[0].mxu0
        %v640 = vadd.f32 %v380, %v639
        %v641 = vpop.f32.mrb[0].mxu0
        %v642 = vadd.f32 %v384, %v641
        %643 = vmatprep.mubr.f32.mxu0 0.0
        %644 = vmatmul.mubr.f32.gmra.mrb[0].mxu0 %v211
        %v645 = vpop.f32.mrb[0].mxu0
        %v646 = vadd.f32 %v380, %v645
        %v647 = vpop.f32.mrb[0].mxu0
        %v648 = vadd.f32 %v384, %v647
        %649 = vmatprep.mubr.f32.mxu0 0.0
        %650 = vmatmul.mubr.f32.gmra.mrb[0].mxu0 %v212
        %v651 = vpop.f32.mrb[0].mxu0
        %v652 = vadd.f32 %v380, %v651
        %v653 = vpop.f32.mrb[0].mxu0
        %v654 = vadd.f32 %v384, %v653
        %655 = vmatprep.mubr.f32.mxu0 0.0
        %656 = vmatmul.mubr.f32.gmra.mrb[0].mxu0 %v213
        %v657 = vpop.f32.mrb[0].mxu0
        %v658 = vadd.f32 %v380, %v657
        %v659 = vpop.f32.mrb[0].mxu0
        %v660 = vadd.f32 %v384, %v659
        %661 = vmatprep.mubr.f32.mxu0 0.0
        %662 = vmatmul.mubr.f32.gmra.mrb[0].mxu0 %v214
        %v663 = vpop.f32.mrb[0].mxu0
        %v664 = vadd.f32 %v380, %v663
        %v665 = vpop.f32.mrb[0].mxu0
        %v666 = vadd.f32 %v384, %v665
        %667 = vmatprep.mubr.f32.mxu0 0.0
        %668 = vmatmul.mubr.f32.gmra.mrb[0].mxu0 %v215
        %v669 = vpop.f32.mrb[0].mxu0
        %v670 = vadd.f32 %v380, %v669
        %v671 = vpop.f32.mrb[0].mxu0
        %v672 = vadd.f32 %v384, %v671
        %673 = vmatprep.mubr.f32.mxu0 0.0
        %674 = vmatmul.mubr.f32.gmra.mrb[0].mxu0 %v216
        %v675 = vpop.f32.mrb[0].mxu0
        %v676 = vadd.f32 %v380, %v675
        %v677 = vpop.f32.mrb[0].mxu0
        %v678 = vadd.f32 %v384, %v677
        %679 = vmatprep.mubr.f32.mxu0 0.0
        %680 = vmatmul.mubr.f32.gmra.mrb[0].mxu0 %v217
        %v681 = vpop.f32.mrb[0].mxu0
        %v682 = vadd.f32 %v380, %v681
        %v683 = vpop.f32.mrb[0].mxu0
        %v684 = vadd.f32 %v384, %v683
        %685 = vmatprep.mubr.f32.mxu0 0.0
        %686 = vmatmul.mubr.f32.gmra.mrb[0].mxu0 %v218
        %v687 = vpop.f32.mrb[0].mxu0
        %v688 = vadd.f32 %v380, %v687
        %v689 = vpop.f32.mrb[0].mxu0
        %v690 = vadd.f32 %v384, %v689
        %691 = vmatprep.mubr.f32.mxu0 0.0
        %692 = vmatmul.mubr.f32.gmra.mrb[0].mxu0 %v219
        %v693 = vpop.f32.mrb[0].mxu0
        %v694 = vadd.f32 %v380, %v693
        %v695 = vpop.f32.mrb[0].mxu0
        %v696 = vadd.f32 %v384, %v695
        %697 = vmatprep.mubr.f32.mxu0 0.0
        %698 = vmatmul.mubr.f32.gmra.mrb[0].mxu0 %v220
        %v699 = vpop.f32.mrb[0].mxu0
        %v700 = vadd.f32 %v380, %v699
        %v701 = vpop.f32.mrb[0].mxu0
        %v702 = vadd.f32 %v384, %v701
        %703 = vmatprep.mubr.f32.mxu0 0.0
        %704 = vmatmul.mubr.f32.gmra.mrb[0].mxu0 %v221
        %v705 = vpop.f32.mrb[0].mxu0
        %v706 = vadd.f32 %v380, %v705
        %v707 = vpop.f32.mrb[0].mxu0
        %v708 = vadd.f32 %v384, %v707
        %709 = vmatprep.mubr.f32.mxu0 0.0
        %710 = vmatmul.mubr.f32.gmra.mrb[0].mxu0 %v222
        %v711 = vpop.f32.mrb[0].mxu0
        %v712 = vadd.f32 %v380, %v711
        %v713 = vpop.f32.mrb[0].mxu0
        %v714 = vadd.f32 %v384, %v713
        %715 = vmatprep.mubr.f32.mxu0 0.0
        %716 = vmatmul.mubr.f32.gmra.mrb[0].mxu0 %v223
        %v717 = vpop.f32.mrb[0].mxu0
        %v718 = vadd.f32 %v380, %v717
        %v719 = vpop.f32.mrb[0].mxu0
        %v720 = vadd.f32 %v384, %v719
        %721 = vmatprep.mubr.f32.mxu0 0.0
        %722 = vmatmul.mubr.f32.gmra.mrb[0].mxu0 %v224
        %v723 = vpop.f32.mrb[0].mxu0
        %v724 = vadd.f32 %v380, %v723
        %v725 = vpop.f32.mrb[0].mxu0
        %v726 = vadd.f32 %v384, %v725
        %727 = vmatprep.mubr.f32.mxu0 0.0
        %728 = vmatmul.mubr.f32.gmra.mrb[0].mxu0 %v225
        %v729 = vpop.f32.mrb[0].mxu0
        %v730 = vadd.f32 %v380, %v729
        %v731 = vpop.f32.mrb[0].mxu0
        %v732 = vadd.f32 %v384, %v731
        %733 = vmatprep.mubr.f32.mxu0 0.0
        %734 = vmatmul.mubr.f32.gmra.mrb[0].mxu0 %v226
        %v735 = vpop.f32.mrb[0].mxu0
        %v736 = vadd.f32 %v380, %v735
        %v737 = vpop.f32.mrb[0].mxu0
        %v738 = vadd.f32 %v384, %v737
        %739 = vmatprep.mubr.f32.mxu0 0.0
        %740 = vmatmul.mubr.f32.gmra.mrb[0].mxu0 %v227
        %v741 = vpop.f32.mrb[0].mxu0
        %v742 = vadd.f32 %v380, %v741
        %v743 = vpop.f32.mrb[0].mxu0
        %v744 = vadd.f32 %v384, %v743
        %745 = vmatprep.mubr.f32.mxu0 0.0
        %746 = vmatmul.mubr.f32.gmra.mrb[0].mxu0 %v228
        %v747 = vpop.f32.mrb[0].mxu0
        %v748 = vadd.f32 %v380, %v747
        %v749 = vpop.f32.mrb[0].mxu0
        %v750 = vadd.f32 %v384, %v749
        %751 = vmatprep.mubr.f32.mxu0 0.0
        %752 = vmatmul.mubr.f32.gmra.mrb[0].mxu0 %v229
        %v753 = vpop.f32.mrb[0].mxu0
        %v754 = vadd.f32 %v380, %v753
        %v755 = vpop.f32.mrb[0].mxu0
        %v756 = vadd.f32 %v384, %v755
        %757 = vmatprep.mubr.f32.mxu0 0.0
        %758 = vmatmul.mubr.f32.gmra.mrb[0].mxu0 %v230
        %v759 = vpop.f32.mrb[0].mxu0
        %v760 = vadd.f32 %v380, %v759
        %v761 = vpop.f32.mrb[0].mxu0
        %v762 = vadd.f32 %v384, %v761
        %763 = vmatprep.mubr.f32.mxu0 0.0
        %764 = vmatmul.mubr.f32.gmra.mrb[0].mxu0 %v231
        %v765 = vpop.f32.mrb[0].mxu0
        %v766 = vadd.f32 %v380, %v765
        %v767 = vpop.f32.mrb[0].mxu0
        %v768 = vadd.f32 %v384, %v767
        %769 = vmatprep.mubr.f32.mxu0 0.0
        %770 = vmatmul.mubr.f32.gmra.mrb[0].mxu0 %v232
        %v771 = vpop.f32.mrb[0].mxu0
        %v772 = vadd.f32 %v380, %v771
        %v773 = vpop.f32.mrb[0].mxu0
        %v774 = vadd.f32 %v384, %v773
        %775 = vmatprep.mubr.f32.mxu0 0.0
        %776 = vmatmul.mubr.f32.gmra.mrb[0].mxu0 %v233
        %v777 = vpop.f32.mrb[0].mxu0
        %v778 = vadd.f32 %v380, %v777
        %v779 = vpop.f32.mrb[0].mxu0
        %v780 = vadd.f32 %v384, %v779
        %781 = vmatprep.mubr.f32.mxu0 0.0
        %782 = vmatmul.mubr.f32.gmra.mrb[0].mxu0 %v234
        %v783 = vpop.f32.mrb[0].mxu0
        %v784 = vadd.f32 %v380, %v783
        %v785 = vpop.f32.mrb[0].mxu0
        %v786 = vadd.f32 %v384, %v785
        %787 = vmatprep.mubr.f32.mxu0 0.0
        %788 = vmatmul.mubr.f32.gmra.mrb[0].mxu0 %v235
        %v789 = vpop.f32.mrb[0].mxu0
        %v790 = vadd.f32 %v380, %v789
        %v791 = vpop.f32.mrb[0].mxu0
        %v792 = vadd.f32 %v384, %v791
        %793 = vmatprep.mubr.f32.mxu0 0.0
        %794 = vmatmul.mubr.f32.gmra.mrb[0].mxu0 %v236
        %v795 = vpop.f32.mrb[0].mxu0
        %v796 = vadd.f32 %v380, %v795
        %v797 = vpop.f32.mrb[0].mxu0
        %v798 = vadd.f32 %v384, %v797
        %799 = vmatprep.mubr.f32.mxu0 0.0
        %800 = vmatmul.mubr.f32.gmra.mrb[0].mxu0 %v237
        %v801 = vpop.f32.mrb[0].mxu0
        %v802 = vadd.f32 %v380, %v801
        %v803 = vpop.f32.mrb[0].mxu0
        %v804 = vadd.f32 %v384, %v803
        %805 = vmatprep.mubr.f32.mxu0 0.0
        %806 = vmatmul.mubr.f32.gmra.mrb[0].mxu0 %v238
        %v807 = vpop.f32.mrb[0].mxu0
        %v808 = vadd.f32 %v380, %v807
        %v809 = vpop.f32.mrb[0].mxu0
        %v810 = vadd.f32 %v384, %v809
        %811 = vmatprep.mubr.f32.mxu0 0.0
        %812 = vmatmul.mubr.f32.gmra.mrb[0].mxu0 %v239
        %v813 = vpop.f32.mrb[0].mxu0
        %v814 = vadd.f32 %v380, %v813
        %v815 = vpop.f32.mrb[0].mxu0
        %v816 = vadd.f32 %v384, %v815
        %817 = vmatprep.mubr.f32.mxu0 0.0
        %818 = vmatmul.mubr.f32.gmra.mrb[0].mxu0 %v240
        %v819 = vpop.f32.mrb[0].mxu0
        %v820 = vadd.f32 %v380, %v819
        %v821 = vpop.f32.mrb[0].mxu0
        %v822 = vadd.f32 %v384, %v821
        %823 = vmatprep.mubr.f32.mxu0 0.0
        %824 = vmatmul.mubr.f32.gmra.mrb[0].mxu0 %v241
        %v825 = vpop.f32.mrb[0].mxu0
        %v826 = vadd.f32 %v380, %v825
        %v827 = vpop.f32.mrb[0].mxu0
        %v828 = vadd.f32 %v384, %v827
        %829 = vmatprep.mubr.f32.mxu0 0.0
        %830 = vmatmul.mubr.f32.gmra.mrb[0].mxu0 %v242
        %v831 = vpop.f32.mrb[0].mxu0
        %v832 = vadd.f32 %v380, %v831
        %v833 = vpop.f32.mrb[0].mxu0
        %v834 = vadd.f32 %v384, %v833
        %835 = vdwg.mxu0
        %v836 = vmax.f32 %v454, 0.0
        %v837 = vmax.f32 %v456, 0.0
        %v838 = vmax.f32 %v460, 0.0
        %v839 = vmax.f32 %v462, 0.0
        %v840 = vmax.f32 %v466, 0.0
        %v841 = vmax.f32 %v468, 0.0
        %v842 = vmax.f32 %v472, 0.0
        %v843 = vmax.f32 %v474, 0.0
        %v844 = vmax.f32 %v478, 0.0
        %v845 = vmax.f32 %v480, 0.0
        %v846 = vmax.f32 %v484, 0.0
        %v847 = vmax.f32 %v486, 0.0
        %v848 = vmax.f32 %v490, 0.0
        %v849 = vmax.f32 %v492, 0.0
        %v850 = vmax.f32 %v496, 0.0
        %v851 = vmax.f32 %v498, 0.0
        %v852 = vmax.f32 %v502, 0.0
        %v853 = vmax.f32 %v504, 0.0
        %v854 = vmax.f32 %v508, 0.0
        %v855 = vmax.f32 %v510, 0.0
        %v856 = vmax.f32 %v514, 0.0
        %v857 = vmax.f32 %v516, 0.0
        %v858 = vmax.f32 %v520, 0.0
        %v859 = vmax.f32 %v522, 0.0
        %v860 = vmax.f32 %v526, 0.0
        %v861 = vmax.f32 %v528, 0.0
        %v862 = vmax.f32 %v532, 0.0
        %v863 = vmax.f32 %v534, 0.0
        %v864 = vmax.f32 %v538, 0.0
        %v865 = vmax.f32 %v540, 0.0
        %v866 = vmax.f32 %v544, 0.0
        %v867 = vmax.f32 %v546, 0.0
        %v868 = vmax.f32 %v550, 0.0
        %v869 = vmax.f32 %v552, 0.0
        %v870 = vmax.f32 %v556, 0.0
        %v871 = vmax.f32 %v558, 0.0
        %v872 = vmax.f32 %v562, 0.0
        %v873 = vmax.f32 %v564, 0.0
        %v874 = vmax.f32 %v568, 0.0
        %v875 = vmax.f32 %v570, 0.0
        %v876 = vmax.f32 %v574, 0.0
        %v877 = vmax.f32 %v576, 0.0
        %v878 = vmax.f32 %v580, 0.0
        %v879 = vmax.f32 %v582, 0.0
        %v880 = vmax.f32 %v586, 0.0
        %v881 = vmax.f32 %v588, 0.0
        %v882 = vmax.f32 %v592, 0.0
        %v883 = vmax.f32 %v594, 0.0
        %v884 = vmax.f32 %v598, 0.0
        %v885 = vmax.f32 %v600, 0.0
        %v886 = vmax.f32 %v604, 0.0
        %v887 = vmax.f32 %v606, 0.0
        %v888 = vmax.f32 %v610, 0.0
        %v889 = vmax.f32 %v612, 0.0
        %v890 = vmax.f32 %v616, 0.0
        %v891 = vmax.f32 %v618, 0.0
        %v892 = vmax.f32 %v622, 0.0
        %v893 = vmax.f32 %v624, 0.0
        %v894 = vmax.f32 %v628, 0.0
        %v895 = vmax.f32 %v630, 0.0
        %v896 = vmax.f32 %v634, 0.0
        %v897 = vmax.f32 %v636, 0.0
        %v898 = vmax.f32 %v640, 0.0
        %v899 = vmax.f32 %v642, 0.0
        %v900 = vmax.f32 %v646, 0.0
        %v901 = vmax.f32 %v648, 0.0
        %v902 = vmax.f32 %v652, 0.0
        %v903 = vmax.f32 %v654, 0.0
        %v904 = vmax.f32 %v658, 0.0
        %v905 = vmax.f32 %v660, 0.0
        %v906 = vmax.f32 %v664, 0.0
        %v907 = vmax.f32 %v666, 0.0
        %v908 = vmax.f32 %v670, 0.0
        %v909 = vmax.f32 %v672, 0.0
        %v910 = vmax.f32 %v676, 0.0
        %v911 = vmax.f32 %v678, 0.0
        %v912 = vmax.f32 %v682, 0.0
        %v913 = vmax.f32 %v684, 0.0
        %v914 = vmax.f32 %v688, 0.0
        %v915 = vmax.f32 %v690, 0.0
        %v916 = vmax.f32 %v694, 0.0
        %v917 = vmax.f32 %v696, 0.0
        %v918 = vmax.f32 %v700, 0.0
        %v919 = vmax.f32 %v702, 0.0
        %v920 = vmax.f32 %v706, 0.0
        %v921 = vmax.f32 %v708, 0.0
        %v922 = vmax.f32 %v712, 0.0
        %v923 = vmax.f32 %v714, 0.0
        %v924 = vmax.f32 %v718, 0.0
        %v925 = vmax.f32 %v720, 0.0
        %v926 = vmax.f32 %v724, 0.0
        %v927 = vmax.f32 %v726, 0.0
        %v928 = vmax.f32 %v730, 0.0
        %v929 = vmax.f32 %v732, 0.0
        %v930 = vmax.f32 %v736, 0.0
        %v931 = vmax.f32 %v738, 0.0
        %v932 = vmax.f32 %v742, 0.0
        %v933 = vmax.f32 %v744, 0.0
        %v934 = vmax.f32 %v748, 0.0
        %v935 = vmax.f32 %v750, 0.0
        %v936 = vmax.f32 %v754, 0.0
        %v937 = vmax.f32 %v756, 0.0
        %v938 = vmax.f32 %v760, 0.0
        %v939 = vmax.f32 %v762, 0.0
        %v940 = vmax.f32 %v766, 0.0
        %v941 = vmax.f32 %v768, 0.0
        %v942 = vmax.f32 %v772, 0.0
        %v943 = vmax.f32 %v774, 0.0
        %v944 = vmax.f32 %v778, 0.0
        %v945 = vmax.f32 %v780, 0.0
        %v946 = vmax.f32 %v784, 0.0
        %v947 = vmax.f32 %v786, 0.0
        %v948 = vmax.f32 %v790, 0.0
        %v949 = vmax.f32 %v792, 0.0
        %v950 = vmax.f32 %v796, 0.0
        %v951 = vmax.f32 %v798, 0.0
        %v952 = vmax.f32 %v802, 0.0
        %v953 = vmax.f32 %v804, 0.0
        %v954 = vmax.f32 %v808, 0.0
        %v955 = vmax.f32 %v810, 0.0
        %v956 = vmax.f32 %v814, 0.0
        %v957 = vmax.f32 %v816, 0.0
        %v958 = vmax.f32 %v820, 0.0
        %v959 = vmax.f32 %v822, 0.0
        %v960 = vmax.f32 %v826, 0.0
        %v961 = vmax.f32 %v828, 0.0
        %v962 = vmax.f32 %v832, 0.0
        %v963 = vmax.f32 %v834, 0.0
        %v965 = vlaneseq
        %v966 = vshrl.u32 %v965, 7
        %v967 = vsub.s32 0, %v966
        %v968 = vrot.slane %v374, %v967
        %v969 = vlaneseq
        %v970 = vshrl.u32 %v969, 7
        %v971 = vsub.s32 1, %v970
        %v972 = vrot.slane %v374, %v971
        %975 = vmatprep.subr.mxu0 %v276
        %976 = vmatpush1.msra.mxu0 %v275
        %977 = vmatprep.subr.mxu0 %v278
        %978 = vmatpush1.msra.mxu0 %v277
        %979 = vmatprep.subr.mxu0 %v280
        %980 = vmatpush1.msra.mxu0 %v279
        %981 = vmatprep.subr.mxu0 %v282
        %982 = vmatpush1.msra.mxu0 %v281
        %983 = vmatprep.subr.mxu0 %v284
        %984 = vmatpush1.msra.mxu0 %v283
        %985 = vmatprep.subr.mxu0 %v286
        %986 = vmatpush1.msra.mxu0 %v285
        %987 = vmatprep.subr.mxu0 %v288
        %988 = vmatpush1.msra.mxu0 %v287
        %989 = vmatprep.subr.mxu0 %v290
        %990 = vmatpush1.msra.mxu0 %v289
        %991 = vmatprep.subr.mxu0 %v292
        %992 = vmatpush1.msra.mxu0 %v291
        %993 = vmatprep.subr.mxu0 %v294
        %994 = vmatpush1.msra.mxu0 %v293
        %995 = vmatprep.subr.mxu0 %v296
        %996 = vmatpush1.msra.mxu0 %v295
        %997 = vmatprep.subr.mxu0 %v298
        %998 = vmatpush1.msra.mxu0 %v297
        %999 = vmatprep.subr.mxu0 %v300
        %1000 = vmatpush1.msra.mxu0 %v299
        %1001 = vmatprep.subr.mxu0 %v302
        %1002 = vmatpush1.msra.mxu0 %v301
        %1003 = vmatprep.subr.mxu0 %v304
        %1004 = vmatpush1.msra.mxu0 %v303
        %1005 = vmatprep.subr.mxu0 %v306
        %1006 = vmatpush1.msra.mxu0 %v305
        %1007 = vmatprep.subr.mxu0 %v308
        %1008 = vmatpush1.msra.mxu0 %v307
        %1009 = vmatprep.subr.mxu0 %v310
        %1010 = vmatpush1.msra.mxu0 %v309
        %1011 = vmatprep.subr.mxu0 %v312
        %1012 = vmatpush1.msra.mxu0 %v311
        %1013 = vmatprep.subr.mxu0 %v314
        %1014 = vmatpush1.msra.mxu0 %v313
        %1015 = vmatprep.subr.mxu0 %v316
        %1016 = vmatpush1.msra.mxu0 %v315
        %1017 = vmatprep.subr.mxu0 %v318
        %1018 = vmatpush1.msra.mxu0 %v317
        %1019 = vmatprep.subr.mxu0 %v320
        %1020 = vmatpush1.msra.mxu0 %v319
        %1021 = vmatprep.subr.mxu0 %v322
        %1022 = vmatpush1.msra.mxu0 %v321
        %1023 = vmatprep.subr.mxu0 %v324
        %1024 = vmatpush1.msra.mxu0 %v323
        %1025 = vmatprep.subr.mxu0 %v326
        %1026 = vmatpush1.msra.mxu0 %v325
        %1027 = vmatprep.subr.mxu0 %v328
        %1028 = vmatpush1.msra.mxu0 %v327
        %1029 = vmatprep.subr.mxu0 %v330
        %1030 = vmatpush1.msra.mxu0 %v329
        %1031 = vmatprep.subr.mxu0 %v332
        %1032 = vmatpush1.msra.mxu0 %v331
        %1033 = vmatprep.subr.mxu0 %v334
        %1034 = vmatpush1.msra.mxu0 %v333
        %1035 = vmatprep.subr.mxu0 %v336
        %1036 = vmatpush1.msra.mxu0 %v335
        %1037 = vmatprep.subr.mxu0 %v338
        %1038 = vmatpush1.msra.mxu0 %v337
        %1039 = vmatprep.mubr.f32.mxu0 %v837
        %1040 = vmatmul.mubr.f32.gmra.mrb[0].mxu0 %v836
        %v1041 = vpop.f32.mrb[0].mxu0
        %v1042 = vadd.f32 %v968, %v1041
        %v1043 = vpop.f32.mrb[0].mxu0
        %v1044 = vadd.f32 %v972, %v1043
        %1045 = vmatprep.mubr.f32.mxu0 %v839
        %1046 = vmatmul.mubr.f32.gmra.mrb[0].mxu0 %v838
        %v1047 = vpop.f32.mrb[0].mxu0
        %v1048 = vadd.f32 %v968, %v1047
        %v1049 = vpop.f32.mrb[0].mxu0
        %v1050 = vadd.f32 %v972, %v1049
        %1051 = vmatprep.mubr.f32.mxu0 %v841
        %1052 = vmatmul.mubr.f32.gmra.mrb[0].mxu0 %v840
        %v1053 = vpop.f32.mrb[0].mxu0
        %v1054 = vadd.f32 %v968, %v1053
        %v1055 = vpop.f32.mrb[0].mxu0
        %v1056 = vadd.f32 %v972, %v1055
        %1057 = vmatprep.mubr.f32.mxu0 %v843
        %1058 = vmatmul.mubr.f32.gmra.mrb[0].mxu0 %v842
        %v1059 = vpop.f32.mrb[0].mxu0
        %v1060 = vadd.f32 %v968, %v1059
        %v1061 = vpop.f32.mrb[0].mxu0
        %v1062 = vadd.f32 %v972, %v1061
        %1063 = vmatprep.mubr.f32.mxu0 %v845
        %1064 = vmatmul.mubr.f32.gmra.mrb[0].mxu0 %v844
        %v1065 = vpop.f32.mrb[0].mxu0
        %v1066 = vadd.f32 %v968, %v1065
        %v1067 = vpop.f32.mrb[0].mxu0
        %v1068 = vadd.f32 %v972, %v1067
        %1069 = vmatprep.mubr.f32.mxu0 %v847
        %1070 = vmatmul.mubr.f32.gmra.mrb[0].mxu0 %v846
        %v1071 = vpop.f32.mrb[0].mxu0
        %v1072 = vadd.f32 %v968, %v1071
        %v1073 = vpop.f32.mrb[0].mxu0
        %v1074 = vadd.f32 %v972, %v1073
        %1075 = vmatprep.mubr.f32.mxu0 %v849
        %1076 = vmatmul.mubr.f32.gmra.mrb[0].mxu0 %v848
        %v1077 = vpop.f32.mrb[0].mxu0
        %v1078 = vadd.f32 %v968, %v1077
        %v1079 = vpop.f32.mrb[0].mxu0
        %v1080 = vadd.f32 %v972, %v1079
        %1081 = vmatprep.mubr.f32.mxu0 %v851
        %1082 = vmatmul.mubr.f32.gmra.mrb[0].mxu0 %v850
        %v1083 = vpop.f32.mrb[0].mxu0
        %v1084 = vadd.f32 %v968, %v1083
        %v1085 = vpop.f32.mrb[0].mxu0
        %v1086 = vadd.f32 %v972, %v1085
        %1087 = vmatprep.mubr.f32.mxu0 %v853
        %1088 = vmatmul.mubr.f32.gmra.mrb[0].mxu0 %v852
        %v1089 = vpop.f32.mrb[0].mxu0
        %v1090 = vadd.f32 %v968, %v1089
        %v1091 = vpop.f32.mrb[0].mxu0
        %v1092 = vadd.f32 %v972, %v1091
        %1093 = vmatprep.mubr.f32.mxu0 %v855
        %1094 = vmatmul.mubr.f32.gmra.mrb[0].mxu0 %v854
        %v1095 = vpop.f32.mrb[0].mxu0
        %v1096 = vadd.f32 %v968, %v1095
        %v1097 = vpop.f32.mrb[0].mxu0
        %v1098 = vadd.f32 %v972, %v1097
        %1099 = vmatprep.mubr.f32.mxu0 %v857
        %1100 = vmatmul.mubr.f32.gmra.mrb[0].mxu0 %v856
        %v1101 = vpop.f32.mrb[0].mxu0
        %v1102 = vadd.f32 %v968, %v1101
        %v1103 = vpop.f32.mrb[0].mxu0
        %v1104 = vadd.f32 %v972, %v1103
        %1105 = vmatprep.mubr.f32.mxu0 %v859
        %1106 = vmatmul.mubr.f32.gmra.mrb[0].mxu0 %v858
        %v1107 = vpop.f32.mrb[0].mxu0
        %v1108 = vadd.f32 %v968, %v1107
        %v1109 = vpop.f32.mrb[0].mxu0
        %v1110 = vadd.f32 %v972, %v1109
        %1111 = vmatprep.mubr.f32.mxu0 %v861
        %1112 = vmatmul.mubr.f32.gmra.mrb[0].mxu0 %v860
        %v1113 = vpop.f32.mrb[0].mxu0
        %v1114 = vadd.f32 %v968, %v1113
        %v1115 = vpop.f32.mrb[0].mxu0
        %v1116 = vadd.f32 %v972, %v1115
        %1117 = vmatprep.mubr.f32.mxu0 %v863
        %1118 = vmatmul.mubr.f32.gmra.mrb[0].mxu0 %v862
        %v1119 = vpop.f32.mrb[0].mxu0
        %v1120 = vadd.f32 %v968, %v1119
        %v1121 = vpop.f32.mrb[0].mxu0
        %v1122 = vadd.f32 %v972, %v1121
        %1123 = vmatprep.mubr.f32.mxu0 %v865
        %1124 = vmatmul.mubr.f32.gmra.mrb[0].mxu0 %v864
        %v1125 = vpop.f32.mrb[0].mxu0
        %v1126 = vadd.f32 %v968, %v1125
        %v1127 = vpop.f32.mrb[0].mxu0
        %v1128 = vadd.f32 %v972, %v1127
        %1129 = vmatprep.mubr.f32.mxu0 %v867
        %1130 = vmatmul.mubr.f32.gmra.mrb[0].mxu0 %v866
        %v1131 = vpop.f32.mrb[0].mxu0
        %v1132 = vadd.f32 %v968, %v1131
        %v1133 = vpop.f32.mrb[0].mxu0
        %v1134 = vadd.f32 %v972, %v1133
        %1135 = vmatprep.mubr.f32.mxu0 %v869
        %1136 = vmatmul.mubr.f32.gmra.mrb[0].mxu0 %v868
        %v1137 = vpop.f32.mrb[0].mxu0
        %v1138 = vadd.f32 %v968, %v1137
        %v1139 = vpop.f32.mrb[0].mxu0
        %v1140 = vadd.f32 %v972, %v1139
        %1141 = vmatprep.mubr.f32.mxu0 %v871
        %1142 = vmatmul.mubr.f32.gmra.mrb[0].mxu0 %v870
        %v1143 = vpop.f32.mrb[0].mxu0
        %v1144 = vadd.f32 %v968, %v1143
        %v1145 = vpop.f32.mrb[0].mxu0
        %v1146 = vadd.f32 %v972, %v1145
        %1147 = vmatprep.mubr.f32.mxu0 %v873
        %1148 = vmatmul.mubr.f32.gmra.mrb[0].mxu0 %v872
        %v1149 = vpop.f32.mrb[0].mxu0
        %v1150 = vadd.f32 %v968, %v1149
        %v1151 = vpop.f32.mrb[0].mxu0
        %v1152 = vadd.f32 %v972, %v1151
        %1153 = vmatprep.mubr.f32.mxu0 %v875
        %1154 = vmatmul.mubr.f32.gmra.mrb[0].mxu0 %v874
        %v1155 = vpop.f32.mrb[0].mxu0
        %v1156 = vadd.f32 %v968, %v1155
        %v1157 = vpop.f32.mrb[0].mxu0
        %v1158 = vadd.f32 %v972, %v1157
        %1159 = vmatprep.mubr.f32.mxu0 %v877
        %1160 = vmatmul.mubr.f32.gmra.mrb[0].mxu0 %v876
        %v1161 = vpop.f32.mrb[0].mxu0
        %v1162 = vadd.f32 %v968, %v1161
        %v1163 = vpop.f32.mrb[0].mxu0
        %v1164 = vadd.f32 %v972, %v1163
        %1165 = vmatprep.mubr.f32.mxu0 %v879
        %1166 = vmatmul.mubr.f32.gmra.mrb[0].mxu0 %v878
        %v1167 = vpop.f32.mrb[0].mxu0
        %v1168 = vadd.f32 %v968, %v1167
        %v1169 = vpop.f32.mrb[0].mxu0
        %v1170 = vadd.f32 %v972, %v1169
        %1171 = vmatprep.mubr.f32.mxu0 %v881
        %1172 = vmatmul.mubr.f32.gmra.mrb[0].mxu0 %v880
        %v1173 = vpop.f32.mrb[0].mxu0
        %v1174 = vadd.f32 %v968, %v1173
        %v1175 = vpop.f32.mrb[0].mxu0
        %v1176 = vadd.f32 %v972, %v1175
        %1177 = vmatprep.mubr.f32.mxu0 %v883
        %1178 = vmatmul.mubr.f32.gmra.mrb[0].mxu0 %v882
        %v1179 = vpop.f32.mrb[0].mxu0
        %v1180 = vadd.f32 %v968, %v1179
        %v1181 = vpop.f32.mrb[0].mxu0
        %v1182 = vadd.f32 %v972, %v1181
        %1183 = vmatprep.mubr.f32.mxu0 %v885
        %1184 = vmatmul.mubr.f32.gmra.mrb[0].mxu0 %v884
        %v1185 = vpop.f32.mrb[0].mxu0
        %v1186 = vadd.f32 %v968, %v1185
        %v1187 = vpop.f32.mrb[0].mxu0
        %v1188 = vadd.f32 %v972, %v1187
        %1189 = vmatprep.mubr.f32.mxu0 %v887
        %1190 = vmatmul.mubr.f32.gmra.mrb[0].mxu0 %v886
        %v1191 = vpop.f32.mrb[0].mxu0
        %v1192 = vadd.f32 %v968, %v1191
        %v1193 = vpop.f32.mrb[0].mxu0
        %v1194 = vadd.f32 %v972, %v1193
        %1195 = vmatprep.mubr.f32.mxu0 %v889
        %1196 = vmatmul.mubr.f32.gmra.mrb[0].mxu0 %v888
        %v1197 = vpop.f32.mrb[0].mxu0
        %v1198 = vadd.f32 %v968, %v1197
        %v1199 = vpop.f32.mrb[0].mxu0
        %v1200 = vadd.f32 %v972, %v1199
        %1201 = vmatprep.mubr.f32.mxu0 %v891
        %1202 = vmatmul.mubr.f32.gmra.mrb[0].mxu0 %v890
        %v1203 = vpop.f32.mrb[0].mxu0
        %v1204 = vadd.f32 %v968, %v1203
        %v1205 = vpop.f32.mrb[0].mxu0
        %v1206 = vadd.f32 %v972, %v1205
        %1207 = vmatprep.mubr.f32.mxu0 %v893
        %1208 = vmatmul.mubr.f32.gmra.mrb[0].mxu0 %v892
        %v1209 = vpop.f32.mrb[0].mxu0
        %v1210 = vadd.f32 %v968, %v1209
        %v1211 = vpop.f32.mrb[0].mxu0
        %v1212 = vadd.f32 %v972, %v1211
        %1213 = vmatprep.mubr.f32.mxu0 %v895
        %1214 = vmatmul.mubr.f32.gmra.mrb[0].mxu0 %v894
        %v1215 = vpop.f32.mrb[0].mxu0
        %v1216 = vadd.f32 %v968, %v1215
        %v1217 = vpop.f32.mrb[0].mxu0
        %v1218 = vadd.f32 %v972, %v1217
        %1219 = vmatprep.mubr.f32.mxu0 %v897
        %1220 = vmatmul.mubr.f32.gmra.mrb[0].mxu0 %v896
        %v1221 = vpop.f32.mrb[0].mxu0
        %v1222 = vadd.f32 %v968, %v1221
        %v1223 = vpop.f32.mrb[0].mxu0
        %v1224 = vadd.f32 %v972, %v1223
        %1225 = vmatprep.mubr.f32.mxu0 %v899
        %1226 = vmatmul.mubr.f32.gmra.mrb[0].mxu0 %v898
        %v1227 = vpop.f32.mrb[0].mxu0
        %v1228 = vadd.f32 %v968, %v1227
        %v1229 = vpop.f32.mrb[0].mxu0
        %v1230 = vadd.f32 %v972, %v1229
        %1231 = vmatprep.mubr.f32.mxu0 %v901
        %1232 = vmatmul.mubr.f32.gmra.mrb[0].mxu0 %v900
        %v1233 = vpop.f32.mrb[0].mxu0
        %v1234 = vadd.f32 %v968, %v1233
        %v1235 = vpop.f32.mrb[0].mxu0
        %v1236 = vadd.f32 %v972, %v1235
        %1237 = vmatprep.mubr.f32.mxu0 %v903
        %1238 = vmatmul.mubr.f32.gmra.mrb[0].mxu0 %v902
        %v1239 = vpop.f32.mrb[0].mxu0
        %v1240 = vadd.f32 %v968, %v1239
        %v1241 = vpop.f32.mrb[0].mxu0
        %v1242 = vadd.f32 %v972, %v1241
        %1243 = vmatprep.mubr.f32.mxu0 %v905
        %1244 = vmatmul.mubr.f32.gmra.mrb[0].mxu0 %v904
        %v1245 = vpop.f32.mrb[0].mxu0
        %v1246 = vadd.f32 %v968, %v1245
        %v1247 = vpop.f32.mrb[0].mxu0
        %v1248 = vadd.f32 %v972, %v1247
        %1249 = vmatprep.mubr.f32.mxu0 %v907
        %1250 = vmatmul.mubr.f32.gmra.mrb[0].mxu0 %v906
        %v1251 = vpop.f32.mrb[0].mxu0
        %v1252 = vadd.f32 %v968, %v1251
        %v1253 = vpop.f32.mrb[0].mxu0
        %v1254 = vadd.f32 %v972, %v1253
        %1255 = vmatprep.mubr.f32.mxu0 %v909
        %1256 = vmatmul.mubr.f32.gmra.mrb[0].mxu0 %v908
        %v1257 = vpop.f32.mrb[0].mxu0
        %v1258 = vadd.f32 %v968, %v1257
        %v1259 = vpop.f32.mrb[0].mxu0
        %v1260 = vadd.f32 %v972, %v1259
        %1261 = vmatprep.mubr.f32.mxu0 %v911
        %1262 = vmatmul.mubr.f32.gmra.mrb[0].mxu0 %v910
        %v1263 = vpop.f32.mrb[0].mxu0
        %v1264 = vadd.f32 %v968, %v1263
        %v1265 = vpop.f32.mrb[0].mxu0
        %v1266 = vadd.f32 %v972, %v1265
        %1267 = vmatprep.mubr.f32.mxu0 %v913
        %1268 = vmatmul.mubr.f32.gmra.mrb[0].mxu0 %v912
        %v1269 = vpop.f32.mrb[0].mxu0
        %v1270 = vadd.f32 %v968, %v1269
        %v1271 = vpop.f32.mrb[0].mxu0
        %v1272 = vadd.f32 %v972, %v1271
        %1273 = vmatprep.mubr.f32.mxu0 %v915
        %1274 = vmatmul.mubr.f32.gmra.mrb[0].mxu0 %v914
        %v1275 = vpop.f32.mrb[0].mxu0
        %v1276 = vadd.f32 %v968, %v1275
        %v1277 = vpop.f32.mrb[0].mxu0
        %v1278 = vadd.f32 %v972, %v1277
        %1279 = vmatprep.mubr.f32.mxu0 %v917
        %1280 = vmatmul.mubr.f32.gmra.mrb[0].mxu0 %v916
        %v1281 = vpop.f32.mrb[0].mxu0
        %v1282 = vadd.f32 %v968, %v1281
        %v1283 = vpop.f32.mrb[0].mxu0
        %v1284 = vadd.f32 %v972, %v1283
        %1285 = vmatprep.mubr.f32.mxu0 %v919
        %1286 = vmatmul.mubr.f32.gmra.mrb[0].mxu0 %v918
        %v1287 = vpop.f32.mrb[0].mxu0
        %v1288 = vadd.f32 %v968, %v1287
        %v1289 = vpop.f32.mrb[0].mxu0
        %v1290 = vadd.f32 %v972, %v1289
        %1291 = vmatprep.mubr.f32.mxu0 %v921
        %1292 = vmatmul.mubr.f32.gmra.mrb[0].mxu0 %v920
        %v1293 = vpop.f32.mrb[0].mxu0
        %v1294 = vadd.f32 %v968, %v1293
        %v1295 = vpop.f32.mrb[0].mxu0
        %v1296 = vadd.f32 %v972, %v1295
        %1297 = vmatprep.mubr.f32.mxu0 %v923
        %1298 = vmatmul.mubr.f32.gmra.mrb[0].mxu0 %v922
        %v1299 = vpop.f32.mrb[0].mxu0
        %v1300 = vadd.f32 %v968, %v1299
        %v1301 = vpop.f32.mrb[0].mxu0
        %v1302 = vadd.f32 %v972, %v1301
        %1303 = vmatprep.mubr.f32.mxu0 %v925
        %1304 = vmatmul.mubr.f32.gmra.mrb[0].mxu0 %v924
        %v1305 = vpop.f32.mrb[0].mxu0
        %v1306 = vadd.f32 %v968, %v1305
        %v1307 = vpop.f32.mrb[0].mxu0
        %v1308 = vadd.f32 %v972, %v1307
        %1309 = vmatprep.mubr.f32.mxu0 %v927
        %1310 = vmatmul.mubr.f32.gmra.mrb[0].mxu0 %v926
        %v1311 = vpop.f32.mrb[0].mxu0
        %v1312 = vadd.f32 %v968, %v1311
        %v1313 = vpop.f32.mrb[0].mxu0
        %v1314 = vadd.f32 %v972, %v1313
        %1315 = vmatprep.mubr.f32.mxu0 %v929
        %1316 = vmatmul.mubr.f32.gmra.mrb[0].mxu0 %v928
        %v1317 = vpop.f32.mrb[0].mxu0
        %v1318 = vadd.f32 %v968, %v1317
        %v1319 = vpop.f32.mrb[0].mxu0
        %v1320 = vadd.f32 %v972, %v1319
        %1321 = vmatprep.mubr.f32.mxu0 %v931
        %1322 = vmatmul.mubr.f32.gmra.mrb[0].mxu0 %v930
        %v1323 = vpop.f32.mrb[0].mxu0
        %v1324 = vadd.f32 %v968, %v1323
        %v1325 = vpop.f32.mrb[0].mxu0
        %v1326 = vadd.f32 %v972, %v1325
        %1327 = vmatprep.mubr.f32.mxu0 %v933
        %1328 = vmatmul.mubr.f32.gmra.mrb[0].mxu0 %v932
        %v1329 = vpop.f32.mrb[0].mxu0
        %v1330 = vadd.f32 %v968, %v1329
        %v1331 = vpop.f32.mrb[0].mxu0
        %v1332 = vadd.f32 %v972, %v1331
        %1333 = vmatprep.mubr.f32.mxu0 %v935
        %1334 = vmatmul.mubr.f32.gmra.mrb[0].mxu0 %v934
        %v1335 = vpop.f32.mrb[0].mxu0
        %v1336 = vadd.f32 %v968, %v1335
        %v1337 = vpop.f32.mrb[0].mxu0
        %v1338 = vadd.f32 %v972, %v1337
        %1339 = vmatprep.mubr.f32.mxu0 %v937
        %1340 = vmatmul.mubr.f32.gmra.mrb[0].mxu0 %v936
        %v1341 = vpop.f32.mrb[0].mxu0
        %v1342 = vadd.f32 %v968, %v1341
        %v1343 = vpop.f32.mrb[0].mxu0
        %v1344 = vadd.f32 %v972, %v1343
        %1345 = vmatprep.mubr.f32.mxu0 %v939
        %1346 = vmatmul.mubr.f32.gmra.mrb[0].mxu0 %v938
        %v1347 = vpop.f32.mrb[0].mxu0
        %v1348 = vadd.f32 %v968, %v1347
        %v1349 = vpop.f32.mrb[0].mxu0
        %v1350 = vadd.f32 %v972, %v1349
        %1351 = vmatprep.mubr.f32.mxu0 %v941
        %1352 = vmatmul.mubr.f32.gmra.mrb[0].mxu0 %v940
        %v1353 = vpop.f32.mrb[0].mxu0
        %v1354 = vadd.f32 %v968, %v1353
        %v1355 = vpop.f32.mrb[0].mxu0
        %v1356 = vadd.f32 %v972, %v1355
        %1357 = vmatprep.mubr.f32.mxu0 %v943
        %1358 = vmatmul.mubr.f32.gmra.mrb[0].mxu0 %v942
        %v1359 = vpop.f32.mrb[0].mxu0
        %v1360 = vadd.f32 %v968, %v1359
        %v1361 = vpop.f32.mrb[0].mxu0
        %v1362 = vadd.f32 %v972, %v1361
        %1363 = vmatprep.mubr.f32.mxu0 %v945
        %1364 = vmatmul.mubr.f32.gmra.mrb[0].mxu0 %v944
        %v1365 = vpop.f32.mrb[0].mxu0
        %v1366 = vadd.f32 %v968, %v1365
        %v1367 = vpop.f32.mrb[0].mxu0
        %v1368 = vadd.f32 %v972, %v1367
        %1369 = vmatprep.mubr.f32.mxu0 %v947
        %1370 = vmatmul.mubr.f32.gmra.mrb[0].mxu0 %v946
        %v1371 = vpop.f32.mrb[0].mxu0
        %v1372 = vadd.f32 %v968, %v1371
        %v1373 = vpop.f32.mrb[0].mxu0
        %v1374 = vadd.f32 %v972, %v1373
        %1375 = vmatprep.mubr.f32.mxu0 %v949
        %1376 = vmatmul.mubr.f32.gmra.mrb[0].mxu0 %v948
        %v1377 = vpop.f32.mrb[0].mxu0
        %v1378 = vadd.f32 %v968, %v1377
        %v1379 = vpop.f32.mrb[0].mxu0
        %v1380 = vadd.f32 %v972, %v1379
        %1381 = vmatprep.mubr.f32.mxu0 %v951
        %1382 = vmatmul.mubr.f32.gmra.mrb[0].mxu0 %v950
        %v1383 = vpop.f32.mrb[0].mxu0
        %v1384 = vadd.f32 %v968, %v1383
        %v1385 = vpop.f32.mrb[0].mxu0
        %v1386 = vadd.f32 %v972, %v1385
        %1387 = vmatprep.mubr.f32.mxu0 %v953
        %1388 = vmatmul.mubr.f32.gmra.mrb[0].mxu0 %v952
        %v1389 = vpop.f32.mrb[0].mxu0
        %v1390 = vadd.f32 %v968, %v1389
        %v1391 = vpop.f32.mrb[0].mxu0
        %v1392 = vadd.f32 %v972, %v1391
        %1393 = vmatprep.mubr.f32.mxu0 %v955
        %1394 = vmatmul.mubr.f32.gmra.mrb[0].mxu0 %v954
        %v1395 = vpop.f32.mrb[0].mxu0
        %v1396 = vadd.f32 %v968, %v1395
        %v1397 = vpop.f32.mrb[0].mxu0
        %v1398 = vadd.f32 %v972, %v1397
        %1399 = vmatprep.mubr.f32.mxu0 %v957
        %1400 = vmatmul.mubr.f32.gmra.mrb[0].mxu0 %v956
        %v1401 = vpop.f32.mrb[0].mxu0
        %v1402 = vadd.f32 %v968, %v1401
        %v1403 = vpop.f32.mrb[0].mxu0
        %v1404 = vadd.f32 %v972, %v1403
        %1405 = vmatprep.mubr.f32.mxu0 %v959
        %1406 = vmatmul.mubr.f32.gmra.mrb[0].mxu0 %v958
        %v1407 = vpop.f32.mrb[0].mxu0
        %v1408 = vadd.f32 %v968, %v1407
        %v1409 = vpop.f32.mrb[0].mxu0
        %v1410 = vadd.f32 %v972, %v1409
        %1411 = vmatprep.mubr.f32.mxu0 %v961
        %1412 = vmatmul.mubr.f32.gmra.mrb[0].mxu0 %v960
        %v1413 = vpop.f32.mrb[0].mxu0
        %v1414 = vadd.f32 %v968, %v1413
        %v1415 = vpop.f32.mrb[0].mxu0
        %v1416 = vadd.f32 %v972, %v1415
        %1417 = vmatprep.mubr.f32.mxu0 %v963
        %1418 = vmatmul.mubr.f32.gmra.mrb[0].mxu0 %v962
        %v1419 = vpop.f32.mrb[0].mxu0
        %v1420 = vadd.f32 %v968, %v1419
        %v1421 = vpop.f32.mrb[0].mxu0
        %v1422 = vadd.f32 %v972, %v1421
        %1423 = vdwg.mxu0
        %v1424 = vmax.f32 %v1042, 0.0
        %v1425 = vmax.f32 %v1044, 0.0
        %v1426 = vmax.f32 %v1048, 0.0
        %v1427 = vmax.f32 %v1050, 0.0
        %v1428 = vmax.f32 %v1054, 0.0
        %v1429 = vmax.f32 %v1056, 0.0
        %v1430 = vmax.f32 %v1060, 0.0
        %v1431 = vmax.f32 %v1062, 0.0
        %v1432 = vmax.f32 %v1066, 0.0
        %v1433 = vmax.f32 %v1068, 0.0
        %v1434 = vmax.f32 %v1072, 0.0
        %v1435 = vmax.f32 %v1074, 0.0
        %v1436 = vmax.f32 %v1078, 0.0
        %v1437 = vmax.f32 %v1080, 0.0
        %v1438 = vmax.f32 %v1084, 0.0
        %v1439 = vmax.f32 %v1086, 0.0
        %v1440 = vmax.f32 %v1090, 0.0
        %v1441 = vmax.f32 %v1092, 0.0
        %v1442 = vmax.f32 %v1096, 0.0
        %v1443 = vmax.f32 %v1098, 0.0
        %v1444 = vmax.f32 %v1102, 0.0
        %v1445 = vmax.f32 %v1104, 0.0
        %v1446 = vmax.f32 %v1108, 0.0
        %v1447 = vmax.f32 %v1110, 0.0
        %v1448 = vmax.f32 %v1114, 0.0
        %v1449 = vmax.f32 %v1116, 0.0
        %v1450 = vmax.f32 %v1120, 0.0
        %v1451 = vmax.f32 %v1122, 0.0
        %v1452 = vmax.f32 %v1126, 0.0
        %v1453 = vmax.f32 %v1128, 0.0
        %v1454 = vmax.f32 %v1132, 0.0
        %v1455 = vmax.f32 %v1134, 0.0
        %v1456 = vmax.f32 %v1138, 0.0
        %v1457 = vmax.f32 %v1140, 0.0
        %v1458 = vmax.f32 %v1144, 0.0
        %v1459 = vmax.f32 %v1146, 0.0
        %v1460 = vmax.f32 %v1150, 0.0
        %v1461 = vmax.f32 %v1152, 0.0
        %v1462 = vmax.f32 %v1156, 0.0
        %v1463 = vmax.f32 %v1158, 0.0
        %v1464 = vmax.f32 %v1162, 0.0
        %v1465 = vmax.f32 %v1164, 0.0
        %v1466 = vmax.f32 %v1168, 0.0
        %v1467 = vmax.f32 %v1170, 0.0
        %v1468 = vmax.f32 %v1174, 0.0
        %v1469 = vmax.f32 %v1176, 0.0
        %v1470 = vmax.f32 %v1180, 0.0
        %v1471 = vmax.f32 %v1182, 0.0
        %v1472 = vmax.f32 %v1186, 0.0
        %v1473 = vmax.f32 %v1188, 0.0
        %v1474 = vmax.f32 %v1192, 0.0
        %v1475 = vmax.f32 %v1194, 0.0
        %v1476 = vmax.f32 %v1198, 0.0
        %v1477 = vmax.f32 %v1200, 0.0
        %v1478 = vmax.f32 %v1204, 0.0
        %v1479 = vmax.f32 %v1206, 0.0
        %v1480 = vmax.f32 %v1210, 0.0
        %v1481 = vmax.f32 %v1212, 0.0
        %v1482 = vmax.f32 %v1216, 0.0
        %v1483 = vmax.f32 %v1218, 0.0
        %v1484 = vmax.f32 %v1222, 0.0
        %v1485 = vmax.f32 %v1224, 0.0
        %v1486 = vmax.f32 %v1228, 0.0
        %v1487 = vmax.f32 %v1230, 0.0
        %v1488 = vmax.f32 %v1234, 0.0
        %v1489 = vmax.f32 %v1236, 0.0
        %v1490 = vmax.f32 %v1240, 0.0
        %v1491 = vmax.f32 %v1242, 0.0
        %v1492 = vmax.f32 %v1246, 0.0
        %v1493 = vmax.f32 %v1248, 0.0
        %v1494 = vmax.f32 %v1252, 0.0
        %v1495 = vmax.f32 %v1254, 0.0
        %v1496 = vmax.f32 %v1258, 0.0
        %v1497 = vmax.f32 %v1260, 0.0
        %v1498 = vmax.f32 %v1264, 0.0
        %v1499 = vmax.f32 %v1266, 0.0
        %v1500 = vmax.f32 %v1270, 0.0
        %v1501 = vmax.f32 %v1272, 0.0
        %v1502 = vmax.f32 %v1276, 0.0
        %v1503 = vmax.f32 %v1278, 0.0
        %v1504 = vmax.f32 %v1282, 0.0
        %v1505 = vmax.f32 %v1284, 0.0
        %v1506 = vmax.f32 %v1288, 0.0
        %v1507 = vmax.f32 %v1290, 0.0
        %v1508 = vmax.f32 %v1294, 0.0
        %v1509 = vmax.f32 %v1296, 0.0
        %v1510 = vmax.f32 %v1300, 0.0
        %v1511 = vmax.f32 %v1302, 0.0
        %v1512 = vmax.f32 %v1306, 0.0
        %v1513 = vmax.f32 %v1308, 0.0
        %v1514 = vmax.f32 %v1312, 0.0
        %v1515 = vmax.f32 %v1314, 0.0
        %v1516 = vmax.f32 %v1318, 0.0
        %v1517 = vmax.f32 %v1320, 0.0
        %v1518 = vmax.f32 %v1324, 0.0
        %v1519 = vmax.f32 %v1326, 0.0
        %v1520 = vmax.f32 %v1330, 0.0
        %v1521 = vmax.f32 %v1332, 0.0
        %v1522 = vmax.f32 %v1336, 0.0
        %v1523 = vmax.f32 %v1338, 0.0
        %v1524 = vmax.f32 %v1342, 0.0
        %v1525 = vmax.f32 %v1344, 0.0
        %v1526 = vmax.f32 %v1348, 0.0
        %v1527 = vmax.f32 %v1350, 0.0
        %v1528 = vmax.f32 %v1354, 0.0
        %v1529 = vmax.f32 %v1356, 0.0
        %v1530 = vmax.f32 %v1360, 0.0
        %v1531 = vmax.f32 %v1362, 0.0
        %v1532 = vmax.f32 %v1366, 0.0
        %v1533 = vmax.f32 %v1368, 0.0
        %v1534 = vmax.f32 %v1372, 0.0
        %v1535 = vmax.f32 %v1374, 0.0
        %v1536 = vmax.f32 %v1378, 0.0
        %v1537 = vmax.f32 %v1380, 0.0
        %v1538 = vmax.f32 %v1384, 0.0
        %v1539 = vmax.f32 %v1386, 0.0
        %v1540 = vmax.f32 %v1390, 0.0
        %v1541 = vmax.f32 %v1392, 0.0
        %v1542 = vmax.f32 %v1396, 0.0
        %v1543 = vmax.f32 %v1398, 0.0
        %v1544 = vmax.f32 %v1402, 0.0
        %v1545 = vmax.f32 %v1404, 0.0
        %v1546 = vmax.f32 %v1408, 0.0
        %v1547 = vmax.f32 %v1410, 0.0
        %v1548 = vmax.f32 %v1414, 0.0
        %v1549 = vmax.f32 %v1416, 0.0
        %v1550 = vmax.f32 %v1420, 0.0
        %v1551 = vmax.f32 %v1422, 0.0
        %1552 = vmatprep.subr.mxu0 0.0
        %1553 = vmatpush1.msra.mxu0 %v339
        %1554 = vmatprep.subr.mxu0 0.0
        %1555 = vmatpush1.msra.mxu0 %v340
        %1556 = vmatprep.subr.mxu0 0.0
        %1557 = vmatpush1.msra.mxu0 %v341
        %1558 = vmatprep.subr.mxu0 0.0
        %1559 = vmatpush1.msra.mxu0 %v342
        %1560 = vmatprep.subr.mxu0 0.0
        %1561 = vmatpush1.msra.mxu0 %v343
        %1562 = vmatprep.subr.mxu0 0.0
        %1563 = vmatpush1.msra.mxu0 %v344
        %1564 = vmatprep.subr.mxu0 0.0
        %1565 = vmatpush1.msra.mxu0 %v345
        %1566 = vmatprep.subr.mxu0 0.0
        %1567 = vmatpush1.msra.mxu0 %v346
        %1568 = vmatprep.subr.mxu0 0.0
        %1569 = vmatpush1.msra.mxu0 %v347
        %1570 = vmatprep.subr.mxu0 0.0
        %1571 = vmatpush1.msra.mxu0 %v348
        %1572 = vmatprep.subr.mxu0 0.0
        %1573 = vmatpush1.msra.mxu0 %v349
        %1574 = vmatprep.subr.mxu0 0.0
        %1575 = vmatpush1.msra.mxu0 %v350
        %1576 = vmatprep.subr.mxu0 0.0
        %1577 = vmatpush1.msra.mxu0 %v351
        %1578 = vmatprep.subr.mxu0 0.0
        %1579 = vmatpush1.msra.mxu0 %v352
        %1580 = vmatprep.subr.mxu0 0.0
        %1581 = vmatpush1.msra.mxu0 %v353
        %1582 = vmatprep.subr.mxu0 0.0
        %1583 = vmatpush1.msra.mxu0 %v354
        %1584 = vmatprep.subr.mxu0 0.0
        %1585 = vmatpush1.msra.mxu0 %v355
        %1586 = vmatprep.subr.mxu0 0.0
        %1587 = vmatpush1.msra.mxu0 %v356
        %1588 = vmatprep.subr.mxu0 0.0
        %1589 = vmatpush1.msra.mxu0 %v357
        %1590 = vmatprep.subr.mxu0 0.0
        %1591 = vmatpush1.msra.mxu0 %v358
        %1592 = vmatprep.subr.mxu0 0.0
        %1593 = vmatpush1.msra.mxu0 %v359
        %1594 = vmatprep.subr.mxu0 0.0
        %1595 = vmatpush1.msra.mxu0 %v360
        %1596 = vmatprep.subr.mxu0 0.0
        %1597 = vmatpush1.msra.mxu0 %v361
        %1598 = vmatprep.subr.mxu0 0.0
        %1599 = vmatpush1.msra.mxu0 %v362
        %1600 = vmatprep.subr.mxu0 0.0
        %1601 = vmatpush1.msra.mxu0 %v363
        %1602 = vmatprep.subr.mxu0 0.0
        %1603 = vmatpush1.msra.mxu0 %v364
        %1604 = vmatprep.subr.mxu0 0.0
        %1605 = vmatpush1.msra.mxu0 %v365
        %1606 = vmatprep.subr.mxu0 0.0
        %1607 = vmatpush1.msra.mxu0 %v366
        %1608 = vmatprep.subr.mxu0 0.0
        %1609 = vmatpush1.msra.mxu0 %v367
        %1610 = vmatprep.subr.mxu0 0.0
        %1611 = vmatpush1.msra.mxu0 %v368
        %1612 = vmatprep.subr.mxu0 0.0
        %1613 = vmatpush1.msra.mxu0 %v369
        %1614 = vmatprep.subr.mxu0 0.0
        %1615 = vmatpush1.msra.mxu0 %v370
        %1616 = vmatprep.mubr.f32.mxu0 %v1425
        %1617 = vmatmul.mubr.f32.gmra.mrb[0].mxu0 %v1424
        %v1618 = vpop.f32.mrb[0].mxu0
        %v1619 = vadd.f32 %v375, %v1618
        %v1620 = vpop.f32.mrb[0].mxu0
        %1621 = vmatprep.mubr.f32.mxu0 %v1427
        %1622 = vmatmul.mubr.f32.gmra.mrb[0].mxu0 %v1426
        %v1623 = vpop.f32.mrb[0].mxu0
        %v1624 = vadd.f32 %v375, %v1623
        %v1625 = vpop.f32.mrb[0].mxu0
        %1626 = vmatprep.mubr.f32.mxu0 %v1429
        %1627 = vmatmul.mubr.f32.gmra.mrb[0].mxu0 %v1428
        %v1628 = vpop.f32.mrb[0].mxu0
        %v1629 = vadd.f32 %v375, %v1628
        %v1630 = vpop.f32.mrb[0].mxu0
        %1631 = vmatprep.mubr.f32.mxu0 %v1431
        %1632 = vmatmul.mubr.f32.gmra.mrb[0].mxu0 %v1430
        %v1633 = vpop.f32.mrb[0].mxu0
        %v1634 = vadd.f32 %v375, %v1633
        %v1635 = vpop.f32.mrb[0].mxu0
        %1636 = vmatprep.mubr.f32.mxu0 %v1433
        %1637 = vmatmul.mubr.f32.gmra.mrb[0].mxu0 %v1432
        %v1638 = vpop.f32.mrb[0].mxu0
        %v1639 = vadd.f32 %v375, %v1638
        %v1640 = vpop.f32.mrb[0].mxu0
        %1641 = vmatprep.mubr.f32.mxu0 %v1435
        %1642 = vmatmul.mubr.f32.gmra.mrb[0].mxu0 %v1434
        %v1643 = vpop.f32.mrb[0].mxu0
        %v1644 = vadd.f32 %v375, %v1643
        %v1645 = vpop.f32.mrb[0].mxu0
        %1646 = vmatprep.mubr.f32.mxu0 %v1437
        %1647 = vmatmul.mubr.f32.gmra.mrb[0].mxu0 %v1436
        %v1648 = vpop.f32.mrb[0].mxu0
        %v1649 = vadd.f32 %v375, %v1648
        %v1650 = vpop.f32.mrb[0].mxu0
        %1651 = vmatprep.mubr.f32.mxu0 %v1439
        %1652 = vmatmul.mubr.f32.gmra.mrb[0].mxu0 %v1438
        %v1653 = vpop.f32.mrb[0].mxu0
        %v1654 = vadd.f32 %v375, %v1653
        %v1655 = vpop.f32.mrb[0].mxu0
        %1656 = vmatprep.mubr.f32.mxu0 %v1441
        %1657 = vmatmul.mubr.f32.gmra.mrb[0].mxu0 %v1440
        %v1658 = vpop.f32.mrb[0].mxu0
        %v1659 = vadd.f32 %v375, %v1658
        %v1660 = vpop.f32.mrb[0].mxu0
        %1661 = vmatprep.mubr.f32.mxu0 %v1443
        %1662 = vmatmul.mubr.f32.gmra.mrb[0].mxu0 %v1442
        %v1663 = vpop.f32.mrb[0].mxu0
        %v1664 = vadd.f32 %v375, %v1663
        %v1665 = vpop.f32.mrb[0].mxu0
        %1666 = vmatprep.mubr.f32.mxu0 %v1445
        %1667 = vmatmul.mubr.f32.gmra.mrb[0].mxu0 %v1444
        %v1668 = vpop.f32.mrb[0].mxu0
        %v1669 = vadd.f32 %v375, %v1668
        %v1670 = vpop.f32.mrb[0].mxu0
        %1671 = vmatprep.mubr.f32.mxu0 %v1447
        %1672 = vmatmul.mubr.f32.gmra.mrb[0].mxu0 %v1446
        %v1673 = vpop.f32.mrb[0].mxu0
        %v1674 = vadd.f32 %v375, %v1673
        %v1675 = vpop.f32.mrb[0].mxu0
        %1676 = vmatprep.mubr.f32.mxu0 %v1449
        %1677 = vmatmul.mubr.f32.gmra.mrb[0].mxu0 %v1448
        %v1678 = vpop.f32.mrb[0].mxu0
        %v1679 = vadd.f32 %v375, %v1678
        %v1680 = vpop.f32.mrb[0].mxu0
        %1681 = vmatprep.mubr.f32.mxu0 %v1451
        %1682 = vmatmul.mubr.f32.gmra.mrb[0].mxu0 %v1450
        %v1683 = vpop.f32.mrb[0].mxu0
        %v1684 = vadd.f32 %v375, %v1683
        %v1685 = vpop.f32.mrb[0].mxu0
        %1686 = vmatprep.mubr.f32.mxu0 %v1453
        %1687 = vmatmul.mubr.f32.gmra.mrb[0].mxu0 %v1452
        %v1688 = vpop.f32.mrb[0].mxu0
        %v1689 = vadd.f32 %v375, %v1688
        %v1690 = vpop.f32.mrb[0].mxu0
        %1691 = vmatprep.mubr.f32.mxu0 %v1455
        %1692 = vmatmul.mubr.f32.gmra.mrb[0].mxu0 %v1454
        %v1693 = vpop.f32.mrb[0].mxu0
        %v1694 = vadd.f32 %v375, %v1693
        %v1695 = vpop.f32.mrb[0].mxu0
        %1696 = vmatprep.mubr.f32.mxu0 %v1457
        %1697 = vmatmul.mubr.f32.gmra.mrb[0].mxu0 %v1456
        %v1698 = vpop.f32.mrb[0].mxu0
        %v1699 = vadd.f32 %v375, %v1698
        %v1700 = vpop.f32.mrb[0].mxu0
        %1701 = vmatprep.mubr.f32.mxu0 %v1459
        %1702 = vmatmul.mubr.f32.gmra.mrb[0].mxu0 %v1458
        %v1703 = vpop.f32.mrb[0].mxu0
        %v1704 = vadd.f32 %v375, %v1703
        %v1705 = vpop.f32.mrb[0].mxu0
        %1706 = vmatprep.mubr.f32.mxu0 %v1461
        %1707 = vmatmul.mubr.f32.gmra.mrb[0].mxu0 %v1460
        %v1708 = vpop.f32.mrb[0].mxu0
        %v1709 = vadd.f32 %v375, %v1708
        %v1710 = vpop.f32.mrb[0].mxu0
        %1711 = vmatprep.mubr.f32.mxu0 %v1463
        %1712 = vmatmul.mubr.f32.gmra.mrb[0].mxu0 %v1462
        %v1713 = vpop.f32.mrb[0].mxu0
        %v1714 = vadd.f32 %v375, %v1713
        %v1715 = vpop.f32.mrb[0].mxu0
        %1716 = vmatprep.mubr.f32.mxu0 %v1465
        %1717 = vmatmul.mubr.f32.gmra.mrb[0].mxu0 %v1464
        %v1718 = vpop.f32.mrb[0].mxu0
        %v1719 = vadd.f32 %v375, %v1718
        %v1720 = vpop.f32.mrb[0].mxu0
        %1721 = vmatprep.mubr.f32.mxu0 %v1467
        %1722 = vmatmul.mubr.f32.gmra.mrb[0].mxu0 %v1466
        %v1723 = vpop.f32.mrb[0].mxu0
        %v1724 = vadd.f32 %v375, %v1723
        %v1725 = vpop.f32.mrb[0].mxu0
        %1726 = vmatprep.mubr.f32.mxu0 %v1469
        %1727 = vmatmul.mubr.f32.gmra.mrb[0].mxu0 %v1468
        %v1728 = vpop.f32.mrb[0].mxu0
        %v1729 = vadd.f32 %v375, %v1728
        %v1730 = vpop.f32.mrb[0].mxu0
        %1731 = vmatprep.mubr.f32.mxu0 %v1471
        %1732 = vmatmul.mubr.f32.gmra.mrb[0].mxu0 %v1470
        %v1733 = vpop.f32.mrb[0].mxu0
        %v1734 = vadd.f32 %v375, %v1733
        %v1735 = vpop.f32.mrb[0].mxu0
        %1736 = vmatprep.mubr.f32.mxu0 %v1473
        %1737 = vmatmul.mubr.f32.gmra.mrb[0].mxu0 %v1472
        %v1738 = vpop.f32.mrb[0].mxu0
        %v1739 = vadd.f32 %v375, %v1738
        %v1740 = vpop.f32.mrb[0].mxu0
        %1741 = vmatprep.mubr.f32.mxu0 %v1475
        %1742 = vmatmul.mubr.f32.gmra.mrb[0].mxu0 %v1474
        %v1743 = vpop.f32.mrb[0].mxu0
        %v1744 = vadd.f32 %v375, %v1743
        %v1745 = vpop.f32.mrb[0].mxu0
        %1746 = vmatprep.mubr.f32.mxu0 %v1477
        %1747 = vmatmul.mubr.f32.gmra.mrb[0].mxu0 %v1476
        %v1748 = vpop.f32.mrb[0].mxu0
        %v1749 = vadd.f32 %v375, %v1748
        %v1750 = vpop.f32.mrb[0].mxu0
        %1751 = vmatprep.mubr.f32.mxu0 %v1479
        %1752 = vmatmul.mubr.f32.gmra.mrb[0].mxu0 %v1478
        %v1753 = vpop.f32.mrb[0].mxu0
        %v1754 = vadd.f32 %v375, %v1753
        %v1755 = vpop.f32.mrb[0].mxu0
        %1756 = vmatprep.mubr.f32.mxu0 %v1481
        %1757 = vmatmul.mubr.f32.gmra.mrb[0].mxu0 %v1480
        %v1758 = vpop.f32.mrb[0].mxu0
        %v1759 = vadd.f32 %v375, %v1758
        %v1760 = vpop.f32.mrb[0].mxu0
        %1761 = vmatprep.mubr.f32.mxu0 %v1483
        %1762 = vmatmul.mubr.f32.gmra.mrb[0].mxu0 %v1482
        %v1763 = vpop.f32.mrb[0].mxu0
        %v1764 = vadd.f32 %v375, %v1763
        %v1765 = vpop.f32.mrb[0].mxu0
        %1766 = vmatprep.mubr.f32.mxu0 %v1485
        %1767 = vmatmul.mubr.f32.gmra.mrb[0].mxu0 %v1484
        %v1768 = vpop.f32.mrb[0].mxu0
        %v1769 = vadd.f32 %v375, %v1768
        %v1770 = vpop.f32.mrb[0].mxu0
        %1771 = vmatprep.mubr.f32.mxu0 %v1487
        %1772 = vmatmul.mubr.f32.gmra.mrb[0].mxu0 %v1486
        %v1773 = vpop.f32.mrb[0].mxu0
        %v1774 = vadd.f32 %v375, %v1773
        %v1775 = vpop.f32.mrb[0].mxu0
        %1776 = vmatprep.mubr.f32.mxu0 %v1489
        %1777 = vmatmul.mubr.f32.gmra.mrb[0].mxu0 %v1488
        %v1778 = vpop.f32.mrb[0].mxu0
        %v1779 = vadd.f32 %v375, %v1778
        %v1780 = vpop.f32.mrb[0].mxu0
        %1781 = vmatprep.mubr.f32.mxu0 %v1491
        %1782 = vmatmul.mubr.f32.gmra.mrb[0].mxu0 %v1490
        %v1783 = vpop.f32.mrb[0].mxu0
        %v1784 = vadd.f32 %v375, %v1783
        %v1785 = vpop.f32.mrb[0].mxu0
        %1786 = vmatprep.mubr.f32.mxu0 %v1493
        %1787 = vmatmul.mubr.f32.gmra.mrb[0].mxu0 %v1492
        %v1788 = vpop.f32.mrb[0].mxu0
        %v1789 = vadd.f32 %v375, %v1788
        %v1790 = vpop.f32.mrb[0].mxu0
        %1791 = vmatprep.mubr.f32.mxu0 %v1495
        %1792 = vmatmul.mubr.f32.gmra.mrb[0].mxu0 %v1494
        %v1793 = vpop.f32.mrb[0].mxu0
        %v1794 = vadd.f32 %v375, %v1793
        %v1795 = vpop.f32.mrb[0].mxu0
        %1796 = vmatprep.mubr.f32.mxu0 %v1497
        %1797 = vmatmul.mubr.f32.gmra.mrb[0].mxu0 %v1496
        %v1798 = vpop.f32.mrb[0].mxu0
        %v1799 = vadd.f32 %v375, %v1798
        %v1800 = vpop.f32.mrb[0].mxu0
        %1801 = vmatprep.mubr.f32.mxu0 %v1499
        %1802 = vmatmul.mubr.f32.gmra.mrb[0].mxu0 %v1498
        %v1803 = vpop.f32.mrb[0].mxu0
        %v1804 = vadd.f32 %v375, %v1803
        %v1805 = vpop.f32.mrb[0].mxu0
        %1806 = vmatprep.mubr.f32.mxu0 %v1501
        %1807 = vmatmul.mubr.f32.gmra.mrb[0].mxu0 %v1500
        %v1808 = vpop.f32.mrb[0].mxu0
        %v1809 = vadd.f32 %v375, %v1808
        %v1810 = vpop.f32.mrb[0].mxu0
        %1811 = vmatprep.mubr.f32.mxu0 %v1503
        %1812 = vmatmul.mubr.f32.gmra.mrb[0].mxu0 %v1502
        %v1813 = vpop.f32.mrb[0].mxu0
        %v1814 = vadd.f32 %v375, %v1813
        %v1815 = vpop.f32.mrb[0].mxu0
        %1816 = vmatprep.mubr.f32.mxu0 %v1505
        %1817 = vmatmul.mubr.f32.gmra.mrb[0].mxu0 %v1504
        %v1818 = vpop.f32.mrb[0].mxu0
        %v1819 = vadd.f32 %v375, %v1818
        %v1820 = vpop.f32.mrb[0].mxu0
        %1821 = vmatprep.mubr.f32.mxu0 %v1507
        %1822 = vmatmul.mubr.f32.gmra.mrb[0].mxu0 %v1506
        %v1823 = vpop.f32.mrb[0].mxu0
        %v1824 = vadd.f32 %v375, %v1823
        %v1825 = vpop.f32.mrb[0].mxu0
        %1826 = vmatprep.mubr.f32.mxu0 %v1509
        %1827 = vmatmul.mubr.f32.gmra.mrb[0].mxu0 %v1508
        %v1828 = vpop.f32.mrb[0].mxu0
        %v1829 = vadd.f32 %v375, %v1828
        %v1830 = vpop.f32.mrb[0].mxu0
        %1831 = vmatprep.mubr.f32.mxu0 %v1511
        %1832 = vmatmul.mubr.f32.gmra.mrb[0].mxu0 %v1510
        %v1833 = vpop.f32.mrb[0].mxu0
        %v1834 = vadd.f32 %v375, %v1833
        %v1835 = vpop.f32.mrb[0].mxu0
        %1836 = vmatprep.mubr.f32.mxu0 %v1513
        %1837 = vmatmul.mubr.f32.gmra.mrb[0].mxu0 %v1512
        %v1838 = vpop.f32.mrb[0].mxu0
        %v1839 = vadd.f32 %v375, %v1838
        %v1840 = vpop.f32.mrb[0].mxu0
        %1841 = vmatprep.mubr.f32.mxu0 %v1515
        %1842 = vmatmul.mubr.f32.gmra.mrb[0].mxu0 %v1514
        %v1843 = vpop.f32.mrb[0].mxu0
        %v1844 = vadd.f32 %v375, %v1843
        %v1845 = vpop.f32.mrb[0].mxu0
        %1846 = vmatprep.mubr.f32.mxu0 %v1517
        %1847 = vmatmul.mubr.f32.gmra.mrb[0].mxu0 %v1516
        %v1848 = vpop.f32.mrb[0].mxu0
        %v1849 = vadd.f32 %v375, %v1848
        %v1850 = vpop.f32.mrb[0].mxu0
        %1851 = vmatprep.mubr.f32.mxu0 %v1519
        %1852 = vmatmul.mubr.f32.gmra.mrb[0].mxu0 %v1518
        %v1853 = vpop.f32.mrb[0].mxu0
        %v1854 = vadd.f32 %v375, %v1853
        %v1855 = vpop.f32.mrb[0].mxu0
        %1856 = vmatprep.mubr.f32.mxu0 %v1521
        %1857 = vmatmul.mubr.f32.gmra.mrb[0].mxu0 %v1520
        %v1858 = vpop.f32.mrb[0].mxu0
        %v1859 = vadd.f32 %v375, %v1858
        %v1860 = vpop.f32.mrb[0].mxu0
        %1861 = vmatprep.mubr.f32.mxu0 %v1523
        %1862 = vmatmul.mubr.f32.gmra.mrb[0].mxu0 %v1522
        %v1863 = vpop.f32.mrb[0].mxu0
        %v1864 = vadd.f32 %v375, %v1863
        %v1865 = vpop.f32.mrb[0].mxu0
        %1866 = vmatprep.mubr.f32.mxu0 %v1525
        %1867 = vmatmul.mubr.f32.gmra.mrb[0].mxu0 %v1524
        %v1868 = vpop.f32.mrb[0].mxu0
        %v1869 = vadd.f32 %v375, %v1868
        %v1870 = vpop.f32.mrb[0].mxu0
        %1871 = vmatprep.mubr.f32.mxu0 %v1527
        %1872 = vmatmul.mubr.f32.gmra.mrb[0].mxu0 %v1526
        %v1873 = vpop.f32.mrb[0].mxu0
        %v1874 = vadd.f32 %v375, %v1873
        %v1875 = vpop.f32.mrb[0].mxu0
        %1876 = vmatprep.mubr.f32.mxu0 %v1529
        %1877 = vmatmul.mubr.f32.gmra.mrb[0].mxu0 %v1528
        %v1878 = vpop.f32.mrb[0].mxu0
        %v1879 = vadd.f32 %v375, %v1878
        %v1880 = vpop.f32.mrb[0].mxu0
        %1881 = vmatprep.mubr.f32.mxu0 %v1531
        %1882 = vmatmul.mubr.f32.gmra.mrb[0].mxu0 %v1530
        %v1883 = vpop.f32.mrb[0].mxu0
        %v1884 = vadd.f32 %v375, %v1883
        %v1885 = vpop.f32.mrb[0].mxu0
        %1886 = vmatprep.mubr.f32.mxu0 %v1533
        %1887 = vmatmul.mubr.f32.gmra.mrb[0].mxu0 %v1532
        %v1888 = vpop.f32.mrb[0].mxu0
        %v1889 = vadd.f32 %v375, %v1888
        %v1890 = vpop.f32.mrb[0].mxu0
        %1891 = vmatprep.mubr.f32.mxu0 %v1535
        %1892 = vmatmul.mubr.f32.gmra.mrb[0].mxu0 %v1534
        %v1893 = vpop.f32.mrb[0].mxu0
        %v1894 = vadd.f32 %v375, %v1893
        %v1895 = vpop.f32.mrb[0].mxu0
        %1896 = vmatprep.mubr.f32.mxu0 %v1537
        %1897 = vmatmul.mubr.f32.gmra.mrb[0].mxu0 %v1536
        %v1898 = vpop.f32.mrb[0].mxu0
        %v1899 = vadd.f32 %v375, %v1898
        %v1900 = vpop.f32.mrb[0].mxu0
        %1901 = vmatprep.mubr.f32.mxu0 %v1539
        %1902 = vmatmul.mubr.f32.gmra.mrb[0].mxu0 %v1538
        %v1903 = vpop.f32.mrb[0].mxu0
        %v1904 = vadd.f32 %v375, %v1903
        %v1905 = vpop.f32.mrb[0].mxu0
        %1906 = vmatprep.mubr.f32.mxu0 %v1541
        %1907 = vmatmul.mubr.f32.gmra.mrb[0].mxu0 %v1540
        %v1908 = vpop.f32.mrb[0].mxu0
        %v1909 = vadd.f32 %v375, %v1908
        %v1910 = vpop.f32.mrb[0].mxu0
        %1911 = vmatprep.mubr.f32.mxu0 %v1543
        %1912 = vmatmul.mubr.f32.gmra.mrb[0].mxu0 %v1542
        %v1913 = vpop.f32.mrb[0].mxu0
        %v1914 = vadd.f32 %v375, %v1913
        %v1915 = vpop.f32.mrb[0].mxu0
        %1916 = vmatprep.mubr.f32.mxu0 %v1545
        %1917 = vmatmul.mubr.f32.gmra.mrb[0].mxu0 %v1544
        %v1918 = vpop.f32.mrb[0].mxu0
        %v1919 = vadd.f32 %v375, %v1918
        %v1920 = vpop.f32.mrb[0].mxu0
        %1921 = vmatprep.mubr.f32.mxu0 %v1547
        %1922 = vmatmul.mubr.f32.gmra.mrb[0].mxu0 %v1546
        %v1923 = vpop.f32.mrb[0].mxu0
        %v1924 = vadd.f32 %v375, %v1923
        %v1925 = vpop.f32.mrb[0].mxu0
        %1926 = vmatprep.mubr.f32.mxu0 %v1549
        %1927 = vmatmul.mubr.f32.gmra.mrb[0].mxu0 %v1548
        %v1928 = vpop.f32.mrb[0].mxu0
        %v1929 = vadd.f32 %v375, %v1928
        %v1930 = vpop.f32.mrb[0].mxu0
        %1931 = vmatprep.mubr.f32.mxu0 %v1551
        %1932 = vmatmul.mubr.f32.gmra.mrb[0].mxu0 %v1550
        %v1933 = vpop.f32.mrb[0].mxu0
        %v1934 = vadd.f32 %v375, %v1933
        %v1935 = vpop.f32.mrb[0].mxu0
        %1936 = vdwg.mxu0
        %1937 = vst [vmem:[%s176] sm:$0xff] %v1619
        %1938 = vst [vmem:[%s176 + $0x8] sm:$0xff] %v1624
        %1939 = vst [vmem:[%s176 + $0x10] sm:$0xff] %v1629
        %1940 = vst [vmem:[%s176 + $0x18] sm:$0xff] %v1634
        %1941 = vst [vmem:[%s176 + $0x20] sm:$0xff] %v1639
        %1942 = vst [vmem:[%s176 + $0x28] sm:$0xff] %v1644
        %1943 = vst [vmem:[%s176 + $0x30] sm:$0xff] %v1649
        %1944 = vst [vmem:[%s176 + $0x38] sm:$0xff] %v1654
        %1945 = vst [vmem:[%s176 + $0x40] sm:$0xff] %v1659
        %1946 = vst [vmem:[%s176 + $0x48] sm:$0xff] %v1664
        %1947 = vst [vmem:[%s176 + $0x50] sm:$0xff] %v1669
        %1948 = vst [vmem:[%s176 + $0x58] sm:$0xff] %v1674
        %1949 = vst [vmem:[%s176 + $0x60] sm:$0xff] %v1679
        %1950 = vst [vmem:[%s176 + $0x68] sm:$0xff] %v1684
        %1951 = vst [vmem:[%s176 + $0x70] sm:$0xff] %v1689
        %1952 = vst [vmem:[%s176 + $0x78] sm:$0xff] %v1694
        %1953 = vst [vmem:[%s176 + $0x80] sm:$0xff] %v1699
        %1954 = vst [vmem:[%s176 + $0x88] sm:$0xff] %v1704
        %1955 = vst [vmem:[%s176 + $0x90] sm:$0xff] %v1709
        %1956 = vst [vmem:[%s176 + $0x98] sm:$0xff] %v1714
        %1957 = vst [vmem:[%s176 + $0xa0] sm:$0xff] %v1719
        %1958 = vst [vmem:[%s176 + $0xa8] sm:$0xff] %v1724
        %1959 = vst [vmem:[%s176 + $0xb0] sm:$0xff] %v1729
        %1960 = vst [vmem:[%s176 + $0xb8] sm:$0xff] %v1734
        %1961 = vst [vmem:[%s176 + $0xc0] sm:$0xff] %v1739
        %1962 = vst [vmem:[%s176 + $0xc8] sm:$0xff] %v1744
        %1963 = vst [vmem:[%s176 + $0xd0] sm:$0xff] %v1749
        %1964 = vst [vmem:[%s176 + $0xd8] sm:$0xff] %v1754
        %1965 = vst [vmem:[%s176 + $0xe0] sm:$0xff] %v1759
        %1966 = vst [vmem:[%s176 + $0xe8] sm:$0xff] %v1764
        %1967 = vst [vmem:[%s176 + $0xf0] sm:$0xff] %v1769
        %1968 = vst [vmem:[%s176 + $0xf8] sm:$0xff] %v1774
        %1969 = vst [vmem:[%s176 + $0x100] sm:$0xff] %v1779
        %1970 = vst [vmem:[%s176 + $0x108] sm:$0xff] %v1784
        %1971 = vst [vmem:[%s176 + $0x110] sm:$0xff] %v1789
        %1972 = vst [vmem:[%s176 + $0x118] sm:$0xff] %v1794
        %1973 = vst [vmem:[%s176 + $0x120] sm:$0xff] %v1799
        %1974 = vst [vmem:[%s176 + $0x128] sm:$0xff] %v1804
        %1975 = vst [vmem:[%s176 + $0x130] sm:$0xff] %v1809
        %1976 = vst [vmem:[%s176 + $0x138] sm:$0xff] %v1814
        %1977 = vst [vmem:[%s176 + $0x140] sm:$0xff] %v1819
        %1978 = vst [vmem:[%s176 + $0x148] sm:$0xff] %v1824
        %1979 = vst [vmem:[%s176 + $0x150] sm:$0xff] %v1829
        %1980 = vst [vmem:[%s176 + $0x158] sm:$0xff] %v1834
        %1981 = vst [vmem:[%s176 + $0x160] sm:$0xff] %v1839
        %1982 = vst [vmem:[%s176 + $0x168] sm:$0xff] %v1844
        %1983 = vst [vmem:[%s176 + $0x170] sm:$0xff] %v1849
        %1984 = vst [vmem:[%s176 + $0x178] sm:$0xff] %v1854
        %1985 = vst [vmem:[%s176 + $0x180] sm:$0xff] %v1859
        %1986 = vst [vmem:[%s176 + $0x188] sm:$0xff] %v1864
        %1987 = vst [vmem:[%s176 + $0x190] sm:$0xff] %v1869
        %1988 = vst [vmem:[%s176 + $0x198] sm:$0xff] %v1874
        %1989 = vst [vmem:[%s176 + $0x1a0] sm:$0xff] %v1879
        %1990 = vst [vmem:[%s176 + $0x1a8] sm:$0xff] %v1884
        %1991 = vst [vmem:[%s176 + $0x1b0] sm:$0xff] %v1889
        %1992 = vst [vmem:[%s176 + $0x1b8] sm:$0xff] %v1894
        %1993 = vst [vmem:[%s176 + $0x1c0] sm:$0xff] %v1899
        %1994 = vst [vmem:[%s176 + $0x1c8] sm:$0xff] %v1904
        %1995 = vst [vmem:[%s176 + $0x1d0] sm:$0xff] %v1909
        %1996 = vst [vmem:[%s176 + $0x1d8] sm:$0xff] %v1914
        %1997 = vst [vmem:[%s176 + $0x1e0] sm:$0xff] %v1919
        %1998 = vst [vmem:[%s176 + $0x1e8] sm:$0xff] %v1924
        %1999 = vst [vmem:[%s176 + $0x1f0] sm:$0xff] %v1929
        %2000 = vst [vmem:[%s176 + $0x1f8] sm:$0xff] %v1934
        %s2001 = sand.u32 %s75, 1
        %s2002 = scalar_lea.sflag [#allocation4], %s2001
        %s2003 = sand.u32 %s75, 1
        %s2004 = smul.addr %s2003, 512
        %s2005 = scalar_lea.vmem [#allocation7], %s2004
        // Predicated region
        $region37: #{_forward_batched.1} parent=27 // pred_check
          %p2006 = pneg %p85
        $region38: #{_forward_batched.1} parent=27 // pred_check_branch
          %2008 = sbr.rel (%p2006) target = $region40
        $region39: #{_forward_batched.1} parent=27 // pred_region
          %s2009 = smul.u32 64, %s20
          %s2011 = ssub.s32 8192, 8192
          %2012 = vsyncadd %s2002, %s2011
          %s2013 = smul.addr %s2009, 128
          %s2014 = scalar_lea.hbm %s2, %s2013
          %s2015 = sshll.u32 %s2005, 4
          %s2016 = int_to_ptr.vmem [resolvable:$true] %s2015
          %2021 = dma.vmem_to_hbm [thread:$0]  %s2016, 8192, %s2014, %s2002, 128, 128, 8
        $region40: #{_forward_batched.1} parent=27 // pred_fallthru
          _
      $region28: #{_forward_batched.1} parent=5 // pred_fallthru
        _
      %p2022 = scmp.le.s32.totalorder 2, %s15
      // Predicated region
      $region41: #{_forward_batched.1} parent=5 // pred_check
        %p2023 = pneg %p2022
      $region42: #{_forward_batched.1} parent=5 // pred_check_branch
        %2025 = sbr.rel (%p2023) target = $region44
      $region43: #{_forward_batched.1} parent=5 // pred_region
        %s2026 = ssub.s32 %s15, 2
        // Predicated region
        $region45: #{_forward_batched.1} parent=43 // pred_check
          %p2027 = pneg %p91
        $region46: #{_forward_batched.1} parent=43 // pred_check_branch
          %2029 = sbr.rel (%p2027) target = $region48
        $region47: #{_forward_batched.1} parent=43 // pred_region
          %s2030 = sand.u32 %s76, 1
          %s2031 = scalar_lea.sflag [#allocation4], %s2030
          %s2032 = sand.u32 %s76, 1
          %s2033 = smul.addr %s2032, 512
          %s2034 = scalar_lea.vmem [#allocation7], %s2033
          %2035 = dma.done %s2031, 8192
        $region48: #{_forward_batched.1} parent=43 // pred_fallthru
          _
      $region44: #{_forward_batched.1} parent=5 // pred_fallthru
        _
    $region6: #{_forward_batched.1} parent=1 // loop_footer
      %s19 = sadd.s32 1, %s15
    $region7: #{_forward_batched.1} parent=1 // loop_footer_branch
      %14 = sbr.rel target = $region3
    $region8: #{_forward_batched.1} parent=1 // loop_exit
      _
    %2036 = vsyncpa [#allocation3], 1
    %s2037 = scalar_lea.sflag [#allocation3], 1
    %2038 = vsyncpa %s2037, 1
    %2039 = vsyncpa [#allocation6], 1
    %2040 = vsyncpa [#allocation4], 1
    %s2041 = scalar_lea.sflag [#allocation4], 1
    %2042 = vsyncpa %s2041, 1

</llo_original>
